<compile_context>
chip_gen: v7x
topology: tpu7x:2x2x1
jax: 0.10.0
libtpu: 0.0.40
codegen_flags: <defaults>
</compile_context>

<pallas_src>
import functools

import numpy as np
import jax
import jax.numpy as jnp
from jax import lax
from jax.experimental import pallas as pl
from jax.experimental.pallas import tpu as pltpu

# ---------------- model dims (small, consistent with the module) ----------------
B = 8          # batch
Z = 16         # input_size (latent dim)
H = 32         # hidden_size
V = 32         # output_size (vocab)
T = 8          # n_steps (= inputs.size(0))
SOS_TOKEN = 1  # integer stand-in for '<s>'


def _decoder_kernel(tf_ref,          # (T,)        int32 SMEM  teacher-forcing mask
                    teacher_oh_ref,  # (T*B, V)    bf16  VMEM  flattened one-hot teacher tokens
                    z_ref,           # (B, Z)      f32
                    wz_fused_ref,    # (Z, 3H+V+H) f32   = [W_ih_z.T | out_w_z.T | z2h_w.T]
                    z2h_b_ref,       # (1, H)      f32
                    gate_b_ref,      # (1, 3H)     f32   = b_ih (+ b_hh on r/z gates)
                    out_b_ref,       # (1, V)      f32
                    sos_gi_ref,      # (1, 3H)     f32   = relu(embed(SOS)) @ W_ih_x.T (exact)
                    gate_tbl_ref,    # (V, 3H)     bf16  = relu(embed_w) @ W_ih_x.T
                    w_fused_ref,     # (H, V+3H)   bf16  = [out_w_h.T | W_hh.T]
                    bhh_n_ref,       # (1, H)      f32   = b_hh[2H:]
                    out_ref,         # (B, T*V)    f32   lane-dense output logits
                    teacher_gi_ref): # (T*B, 3H)   f32   VMEM scratch: teacher gi_x per step
    z = z_ref[...]
    w_fused = w_fused_ref[...]                                              # (H, V+3H) bf16
    bhh_n = jnp.broadcast_to(bhh_n_ref[...], (B, H))                        # hoisted broadcast

    # ---- prologue: every z-dependent contribution from ONE fused matmul (off-chain) ----
    zf = jnp.dot(z, wz_fused_ref[...], preferred_element_type=jnp.float32)  # (B, 3H+V+H)
    gi_const = zf[:, :3 * H] + gate_b_ref[...]                              # (B, 3H)
    out_const = zf[:, 3 * H:3 * H + V] + out_b_ref[...]                     # (B, V)
    h = zf[:, 3 * H + V:] + z2h_b_ref[...]                                  # (B, H) = z2h(z)

    # Teacher-token gate contributions for every step, one batched matmul (off-chain).
    teacher_gi_ref[...] = jnp.dot(teacher_oh_ref[...], gate_tbl_ref[...],
                                  preferred_element_type=jnp.float32)       # (T*B, 3H)

    # gh_0 from the initial hidden state (only the W_hh half of the fused weight matters).
    gh = jnp.dot(h.astype(jnp.bfloat16), w_fused,
                 preferred_element_type=jnp.float32)[:, V:]                 # (B, 3H)

    col_v = lax.broadcasted_iota(jnp.int32, (B, V), 1)
    gi_x = jnp.broadcast_to(sos_gi_ref[...], (B, 3 * H))                    # SOS token, step 0

    for i in range(T):  # static unroll (T is small and compile-time constant)
        # --- GRU cell; all elementwise math in f32 (v5e has no bf16 VPU/EUP) ---
        gi = gi_const + gi_x                                                # (B, 3H)
        rz = jax.nn.sigmoid(gi[:, :2 * H] + gh[:, :2 * H])                  # one EUP push (r,z)
        r = rz[:, :H]
        zg = rz[:, H:]
        n = jnp.tanh(gi[:, 2 * H:] + r * (gh[:, 2 * H:] + bhh_n))
        h = (1.0 - zg) * n + zg * h                                         # (B, H)

        # One 128-lane-wide MXU op: this step's logits + next step's gh.
        fused = jnp.dot(h.astype(jnp.bfloat16), w_fused,
                        preferred_element_type=jnp.float32)                 # (B, V+3H)=(8,128)
        logits = fused[:, :V] + out_const                                   # (B, V)
        gh = fused[:, V:]                                                   # (B, 3H) -> step i+1

        out_ref[:, i * V:(i + 1) * V] = logits                              # static-slice store

        if i < T - 1:
            # Input-gate contribution of the token fed to step i+1.  lax.cond skips the
            # whole sampling path (2 XLU reductions, one-hot, MXU matmul) on
            # teacher-forced steps.
            def _teacher():
                return teacher_gi_ref[i * B:(i + 1) * B, :]                 # (B, 3H)

            def _sample():
                # MAX_SAMPLE -> argmax (first occurrence on ties), one-hot in bf16.
                mx = jnp.max(logits, axis=1, keepdims=True)
                idx = jnp.min(jnp.where(logits >= mx, col_v, V),
                              axis=1, keepdims=True)
                sampled_oh = (col_v == idx).astype(jnp.bfloat16)            # (B, V)
                return jnp.dot(sampled_oh, gate_tbl_ref[...],
                               preferred_element_type=jnp.float32)          # (B, 3H)

            gi_x = lax.cond(tf_ref[i] != 0, _teacher, _sample)


def decoder_rnn_forward(params, z, tokens, tf_mask):
    """Returns logits of shape (B, T, V), matching outputs.transpose(0, 1)."""
    # One-hot the teacher tokens outside the kernel (tiny, fuses into XLA), bf16,
    # flattened to (T*B, V) for the kernel's batched prologue matmul.
    teacher_oh = jax.nn.one_hot(tokens.reshape(T * B), V, dtype=jnp.bfloat16)

    vmem = pl.BlockSpec(memory_space=pltpu.MemorySpace.VMEM)
    smem = pl.BlockSpec(memory_space=pltpu.MemorySpace.SMEM)

    out_flat = pl.pallas_call(
        _decoder_kernel,
        out_shape=jax.ShapeDtypeStruct((B, T * V), jnp.float32),
        in_specs=[smem] + [vmem] * 10,
        out_specs=vmem,
        scratch_shapes=[pltpu.VMEM((T * B, 3 * H), jnp.float32)],
        # TODO(synk): for multiple independent (z, tokens) decodes, add a leading
        # "parallel" grid axis over sequences so v7x's second TensorCore is used;
        # never split the single B=8 recurrence across cores.
    )(tf_mask, teacher_oh, z,
      params["wz_fused"], params["z2h_b"], params["gate_b"], params["out_b"],
      params["sos_gi"], params["gate_tbl"], params["w_fused"], params["bhh_n"])

    # Row-major reshape is free and equals PyTorch's outputs.transpose(0, 1).
    return out_flat.reshape(B, T, V)


def init_params(key):
    ks = jax.random.split(key, 10)
    s = 0.1
    embed_w = jax.random.normal(ks[0], (V, H), jnp.float32) * s          # nn.Embedding(V, H)
    z2h_w = jax.random.normal(ks[1], (H, Z), jnp.float32) * s            # nn.Linear(Z, H)
    z2h_b = jax.random.normal(ks[2], (H,), jnp.float32) * s
    w_ih = jax.random.normal(ks[3], (3 * H, H + Z), jnp.float32) * s     # GRU weight_ih_l0
    w_hh = jax.random.normal(ks[4], (3 * H, H), jnp.float32) * s         # GRU weight_hh_l0
    b_ih = jax.random.normal(ks[5], (3 * H,), jnp.float32) * s
    b_hh = jax.random.normal(ks[6], (3 * H,), jnp.float32) * s
    out_w = jax.random.normal(ks[7], (V, H + Z), jnp.float32) * s        # nn.Linear(H+Z, V)
    out_b = jax.random.normal(ks[8], (V,), jnp.float32) * s

    # --- exact algebraic preprocessing of the forward pass ---
    wih_x_t = w_ih[:, :H].T                                   # (H, 3H)
    wih_z_t = w_ih[:, H:].T                                   # (Z, 3H)
    # Fold embedding lookup + ReLU into the gate matmul (one-hot selects rows).
    gate_tbl = jnp.maximum(embed_w, 0.0) @ wih_x_t            # (V, 3H)  f32
    sos_gi = gate_tbl[SOS_TOKEN]                              # (3H,)    exact f32 for step 0
    # Combine b_ih + b_hh for the r/z gates; b_hh_n must stay inside the r*(.) term.
    gate_b = b_ih.at[:2 * H].add(b_hh[:2 * H])                # (3H,)
    bhh_n = b_hh[2 * H:]                                      # (H,)

    # Fused weights: all z-consumers in one prologue matmul; both h_new-consumers
    # (output projection + next-step W_hh) in one 128-lane-wide per-step matmul.
    wz_fused = jnp.concatenate([wih_z_t, out_w[:, H:].T, z2h_w.T], axis=1)  # (Z, 3H+V+H)
    w_fused = jnp.concatenate([out_w[:, :H].T, w_hh.T], axis=1)             # (H, V+3H)

    return {
        "wz_fused": wz_fused,                                 # (Z, 160) f32
        "z2h_b": z2h_b.reshape(1, H),                         # (1, H)   f32
        "gate_b": gate_b.reshape(1, 3 * H),                   # (1, 3H)  f32
        "out_b": out_b.reshape(1, V),                         # (1, V)   f32
        "sos_gi": sos_gi.reshape(1, 3 * H),                   # (1, 3H)  f32
        "gate_tbl": gate_tbl.astype(jnp.bfloat16),            # (V, 3H)  bf16
        "w_fused": w_fused.astype(jnp.bfloat16),              # (H, 128) bf16
        "bhh_n": bhh_n.reshape(1, H),                         # (1, H)   f32
    }


if __name__ == "__main__":
    key = jax.random.PRNGKey(0)
    kp, kz, kt = jax.random.split(key, 3)

    params = init_params(kp)

    z = jax.random.normal(kz, (B, Z), jnp.float32)                        # latent
    tokens = jax.random.randint(kt, (T, B, 1), 0, V, dtype=jnp.int32)     # teacher inputs

    temperature = 0.5
    # use_teacher_forcing = np.random.randn() < temperature  (host coin flip per step)
    np.random.seed(0)
    tf_mask = jnp.asarray((np.random.randn(T) < temperature).astype(np.int32))

    fwd = jax.jit(functools.partial(decoder_rnn_forward, params))
    out = fwd(z, tokens, tf_mask)
    jax.block_until_ready(out)

    assert out.shape == (B, T, V) and out.dtype == jnp.float32
    print("KERNEL_OK")
</pallas_src>

<mosaic_0001>
module attributes {stable_mosaic.version = 11 : i64} {
  func.func @_decoder_kernel(%arg0: memref<8xi32, #tpu.memory_space<smem>>, %arg1: memref<64x32xbf16, #tpu.memory_space<vmem>>, %arg2: memref<8x16xf32, #tpu.memory_space<vmem>>, %arg3: memref<16x160xf32, #tpu.memory_space<vmem>>, %arg4: memref<1x32xf32, #tpu.memory_space<vmem>>, %arg5: memref<1x96xf32, #tpu.memory_space<vmem>>, %arg6: memref<1x32xf32, #tpu.memory_space<vmem>>, %arg7: memref<1x96xf32, #tpu.memory_space<vmem>>, %arg8: memref<32x96xbf16, #tpu.memory_space<vmem>>, %arg9: memref<32x128xbf16, #tpu.memory_space<vmem>>, %arg10: memref<1x32xf32, #tpu.memory_space<vmem>>, %arg11: memref<8x256xf32, #tpu.memory_space<vmem>>, %arg12: memref<64x96xf32, #tpu.memory_space<vmem>>) attributes {dimension_semantics = [], scalar_prefetch = 0 : i64, scratch_operands = 1 : i64, tpu.core_type = #tpu.core_type<tc>} {
    %c0 = arith.constant 0 : index
    %c0_0 = arith.constant 0 : index
    %0 = vector.load %arg2[%c0, %c0_0] : memref<8x16xf32, #tpu.memory_space<vmem>>, vector<8x16xf32>
    %c0_1 = arith.constant 0 : index
    %c0_2 = arith.constant 0 : index
    %1 = vector.load %arg9[%c0_1, %c0_2] : memref<32x128xbf16, #tpu.memory_space<vmem>>, vector<32x128xbf16>
    %c0_3 = arith.constant 0 : index
    %c0_4 = arith.constant 0 : index
    %2 = vector.load %arg10[%c0_3, %c0_4] : memref<1x32xf32, #tpu.memory_space<vmem>>, vector<1x32xf32>
    %3 = vector.shape_cast %2 : vector<1x32xf32> to vector<1x32xf32>
    %4 = vector.broadcast %3 : vector<1x32xf32> to vector<8x32xf32>
    %c0_5 = arith.constant 0 : index
    %c0_6 = arith.constant 0 : index
    %5 = vector.load %arg3[%c0_5, %c0_6] : memref<16x160xf32, #tpu.memory_space<vmem>>, vector<16x160xf32>
    %cst = arith.constant dense<0.000000e+00> : vector<8x160xf32>
    %6 = tpu.matmul %0, %5, %cst {dimension_numbers = #tpu.dot_dimension_numbers<[1], [0], [0], [1], [0, 0, 1, 1], [], []>} : vector<8x16xf32>, vector<16x160xf32>, vector<8x160xf32> -> vector<8x160xf32>
    %7 = vector.extract_strided_slice %6 {offsets = [0, 0], sizes = [8, 96], strides = [1, 1]} : vector<8x160xf32> to vector<8x96xf32>
    %c0_7 = arith.constant 0 : index
    %c0_8 = arith.constant 0 : index
    %8 = vector.load %arg5[%c0_7, %c0_8] : memref<1x96xf32, #tpu.memory_space<vmem>>, vector<1x96xf32>
    %9 = vector.broadcast %8 : vector<1x96xf32> to vector<8x96xf32>
    %10 = arith.addf %7, %9 : vector<8x96xf32>
    %11 = vector.extract_strided_slice %6 {offsets = [0, 96], sizes = [8, 32], strides = [1, 1]} : vector<8x160xf32> to vector<8x32xf32>
    %c0_9 = arith.constant 0 : index
    %c0_10 = arith.constant 0 : index
    %12 = vector.load %arg6[%c0_9, %c0_10] : memref<1x32xf32, #tpu.memory_space<vmem>>, vector<1x32xf32>
    %13 = vector.broadcast %12 : vector<1x32xf32> to vector<8x32xf32>
    %14 = arith.addf %11, %13 : vector<8x32xf32>
    %15 = vector.extract_strided_slice %6 {offsets = [0, 128], sizes = [8, 32], strides = [1, 1]} : vector<8x160xf32> to vector<8x32xf32>
    %c0_11 = arith.constant 0 : index
    %c0_12 = arith.constant 0 : index
    %16 = vector.load %arg4[%c0_11, %c0_12] : memref<1x32xf32, #tpu.memory_space<vmem>>, vector<1x32xf32>
    %17 = vector.broadcast %16 : vector<1x32xf32> to vector<8x32xf32>
    %18 = arith.addf %15, %17 : vector<8x32xf32>
    %c0_13 = arith.constant 0 : index
    %c0_14 = arith.constant 0 : index
    %19 = vector.load %arg1[%c0_13, %c0_14] : memref<64x32xbf16, #tpu.memory_space<vmem>>, vector<64x32xbf16>
    %c0_15 = arith.constant 0 : index
    %c0_16 = arith.constant 0 : index
    %20 = vector.load %arg8[%c0_15, %c0_16] : memref<32x96xbf16, #tpu.memory_space<vmem>>, vector<32x96xbf16>
    %cst_17 = arith.constant dense<0.000000e+00> : vector<64x96xf32>
    %21 = tpu.matmul %19, %20, %cst_17 {dimension_numbers = #tpu.dot_dimension_numbers<[1], [0], [0], [1], [0, 0, 1, 1], [], []>} : vector<64x32xbf16>, vector<32x96xbf16>, vector<64x96xf32> -> vector<64x96xf32>
    %c0_18 = arith.constant 0 : index
    %c0_19 = arith.constant 0 : index
    %22 = vector.load %arg12[%c0_18, %c0_19] : memref<64x96xf32, #tpu.memory_space<vmem>>, vector<64x96xf32>
    tpu.vector_store %arg12[%c0_18, %c0_19], %21 {strides = array<i32>} : memref<64x96xf32, #tpu.memory_space<vmem>>, vector<64x96xf32>,
    %23 = arith.truncf %18 : vector<8x32xf32> to vector<8x32xbf16>
    %cst_20 = arith.constant dense<0.000000e+00> : vector<8x128xf32>
    %24 = tpu.matmul %23, %1, %cst_20 {dimension_numbers = #tpu.dot_dimension_numbers<[1], [0], [0], [1], [0, 0, 1, 1], [], []>} : vector<8x32xbf16>, vector<32x128xbf16>, vector<8x128xf32> -> vector<8x128xf32>
    %25 = vector.extract_strided_slice %24 {offsets = [0, 32], sizes = [8, 96], strides = [1, 1]} : vector<8x128xf32> to vector<8x96xf32>
    %26 = tpu.iota {dimensions = array<i32: 1>} : vector<8x32xi32>
    %c0_21 = arith.constant 0 : index
    %c0_22 = arith.constant 0 : index
    %27 = vector.load %arg7[%c0_21, %c0_22] : memref<1x96xf32, #tpu.memory_space<vmem>>, vector<1x96xf32>
    %28 = vector.shape_cast %27 : vector<1x96xf32> to vector<1x96xf32>
    %29 = vector.broadcast %28 : vector<1x96xf32> to vector<8x96xf32>
    %30 = arith.addf %10, %29 : vector<8x96xf32>
    %31 = vector.extract_strided_slice %30 {offsets = [0, 0], sizes = [8, 64], strides = [1, 1]} : vector<8x96xf32> to vector<8x64xf32>
    %32 = vector.extract_strided_slice %25 {offsets = [0, 0], sizes = [8, 64], strides = [1, 1]} : vector<8x96xf32> to vector<8x64xf32>
    %33 = arith.addf %31, %32 : vector<8x64xf32>
    %34 = arith.negf %33 : vector<8x64xf32>
    %35 = math.exp %34 : vector<8x64xf32>
    %cst_23 = arith.constant 1.000000e+00 : f32
    %36 = vector.broadcast %cst_23 : f32 to vector<8x64xf32>
    %37 = arith.addf %36, %35 : vector<8x64xf32>
    %38 = arith.divf %36, %37 : vector<8x64xf32>
    %39 = vector.extract_strided_slice %38 {offsets = [0, 0], sizes = [8, 32], strides = [1, 1]} : vector<8x64xf32> to vector<8x32xf32>
    %40 = vector.extract_strided_slice %38 {offsets = [0, 32], sizes = [8, 32], strides = [1, 1]} : vector<8x64xf32> to vector<8x32xf32>
    %41 = vector.extract_strided_slice %30 {offsets = [0, 64], sizes = [8, 32], strides = [1, 1]} : vector<8x96xf32> to vector<8x32xf32>
    %42 = vector.extract_strided_slice %25 {offsets = [0, 64], sizes = [8, 32], strides = [1, 1]} : vector<8x96xf32> to vector<8x32xf32>
    %43 = arith.addf %42, %4 : vector<8x32xf32>
    %44 = arith.mulf %39, %43 : vector<8x32xf32>
    %45 = arith.addf %41, %44 : vector<8x32xf32>
    %46 = math.tanh %45 : vector<8x32xf32>
    %cst_24 = arith.constant 1.000000e+00 : f32
    %47 = vector.broadcast %cst_24 : f32 to vector<8x32xf32>
    %48 = arith.subf %47, %40 : vector<8x32xf32>
    %49 = arith.mulf %48, %46 : vector<8x32xf32>
    %50 = arith.mulf %40, %18 : vector<8x32xf32>
    %51 = arith.addf %49, %50 : vector<8x32xf32>
    %52 = arith.truncf %51 : vector<8x32xf32> to vector<8x32xbf16>
    %cst_25 = arith.constant dense<0.000000e+00> : vector<8x128xf32>
    %53 = tpu.matmul %52, %1, %cst_25 {dimension_numbers = #tpu.dot_dimension_numbers<[1], [0], [0], [1], [0, 0, 1, 1], [], []>} : vector<8x32xbf16>, vector<32x128xbf16>, vector<8x128xf32> -> vector<8x128xf32>
    %54 = vector.extract_strided_slice %53 {offsets = [0, 0], sizes = [8, 32], strides = [1, 1]} : vector<8x128xf32> to vector<8x32xf32>
    %55 = arith.addf %54, %14 : vector<8x32xf32>
    %56 = vector.extract_strided_slice %53 {offsets = [0, 32], sizes = [8, 96], strides = [1, 1]} : vector<8x128xf32> to vector<8x96xf32>
    %c0_26 = arith.constant 0 : index
    %c0_27 = arith.constant 0 : index
    %57 = vector.load %arg11[%c0_26, %c0_27] : memref<8x256xf32, #tpu.memory_space<vmem>>, vector<8x32xf32>
    tpu.vector_store %arg11[%c0_26, %c0_27], %55 {strides = array<i32>} : memref<8x256xf32, #tpu.memory_space<vmem>>, vector<8x32xf32>,
    %c0_28 = arith.constant 0 : index
    %58 = memref.load %arg0[%c0_28] : memref<8xi32, #tpu.memory_space<smem>>
    %c0_i32 = arith.constant 0 : i32
    %59 = arith.cmpi ne, %58, %c0_i32 : i32
    %60 = arith.extui %59 : i1 to i32
    %c0_i32_29 = arith.constant 0 : i32
    %61 = arith.cmpi ne, %60, %c0_i32_29 : i32
    %62 = scf.if %61 -> (vector<8x96xf32>) {
      %c0_70 = arith.constant 0 : index
      %c0_71 = arith.constant 0 : index
      %288 = vector.load %arg12[%c0_70, %c0_71] : memref<64x96xf32, #tpu.memory_space<vmem>>, vector<8x96xf32>
      scf.yield %288 : vector<8x96xf32>
    } else {
      %cst_70 = arith.constant dense<0xFF800000> : vector<8xf32>
      %288 = vector.multi_reduction <maximumf>, %55, %cst_70 [1] : vector<8x32xf32> to vector<8xf32>
      %289 = vector.shape_cast %288 : vector<8xf32> to vector<8x1xf32>
      %290 = vector.broadcast %289 : vector<8x1xf32> to vector<8x32xf32>
      %291 = arith.cmpf oge, %55, %290 : vector<8x32xf32>
      %c32_i32 = arith.constant 32 : i32
      %292 = vector.broadcast %c32_i32 : i32 to vector<8x32xi32>
      %293 = arith.select %291, %26, %292 : vector<8x32xi1>, vector<8x32xi32>
      %cst_71 = arith.constant dense<2147483647> : vector<8xi32>
      %294 = vector.multi_reduction <minsi>, %293, %cst_71 [1] : vector<8x32xi32> to vector<8xi32>
      %295 = vector.shape_cast %294 : vector<8xi32> to vector<8x1xi32>
      %296 = vector.broadcast %295 : vector<8x1xi32> to vector<8x32xi32>
      %297 = arith.cmpi eq, %26, %296 : vector<8x32xi32>
      %298 = arith.extui %297 : vector<8x32xi1> to vector<8x32xi32>
      %299 = arith.sitofp %298 : vector<8x32xi32> to vector<8x32xf32>
      %300 = arith.truncf %299 : vector<8x32xf32> to vector<8x32xbf16>
      %c0_72 = arith.constant 0 : index
      %c0_73 = arith.constant 0 : index
      %301 = vector.load %arg8[%c0_72, %c0_73] : memref<32x96xbf16, #tpu.memory_space<vmem>>, vector<32x96xbf16>
      %cst_74 = arith.constant dense<0.000000e+00> : vector<8x96xf32>
      %302 = tpu.matmul %300, %301, %cst_74 {dimension_numbers = #tpu.dot_dimension_numbers<[1], [0], [0], [1], [0, 0, 1, 1], [], []>} : vector<8x32xbf16>, vector<32x96xbf16>, vector<8x96xf32> -> vector<8x96xf32>
      scf.yield %302 : vector<8x96xf32>
    }
    %63 = arith.addf %10, %62 : vector<8x96xf32>
    %64 = vector.extract_strided_slice %63 {offsets = [0, 0], sizes = [8, 64], strides = [1, 1]} : vector<8x96xf32> to vector<8x64xf32>
    %65 = vector.extract_strided_slice %56 {offsets = [0, 0], sizes = [8, 64], strides = [1, 1]} : vector<8x96xf32> to vector<8x64xf32>
    %66 = arith.addf %64, %65 : vector<8x64xf32>
    %67 = arith.negf %66 : vector<8x64xf32>
    %68 = math.exp %67 : vector<8x64xf32>
    %cst_30 = arith.constant 1.000000e+00 : f32
    %69 = vector.broadcast %cst_30 : f32 to vector<8x64xf32>
    %70 = arith.addf %69, %68 : vector<8x64xf32>
    %71 = arith.divf %69, %70 : vector<8x64xf32>
    %72 = vector.extract_strided_slice %71 {offsets = [0, 0], sizes = [8, 32], strides = [1, 1]} : vector<8x64xf32> to vector<8x32xf32>
    %73 = vector.extract_strided_slice %71 {offsets = [0, 32], sizes = [8, 32], strides = [1, 1]} : vector<8x64xf32> to vector<8x32xf32>
    %74 = vector.extract_strided_slice %63 {offsets = [0, 64], sizes = [8, 32], strides = [1, 1]} : vector<8x96xf32> to vector<8x32xf32>
    %75 = vector.extract_strided_slice %56 {offsets = [0, 64], sizes = [8, 32], strides = [1, 1]} : vector<8x96xf32> to vector<8x32xf32>
    %76 = arith.addf %75, %4 : vector<8x32xf32>
    %77 = arith.mulf %72, %76 : vector<8x32xf32>
    %78 = arith.addf %74, %77 : vector<8x32xf32>
    %79 = math.tanh %78 : vector<8x32xf32>
    %cst_31 = arith.constant 1.000000e+00 : f32
    %80 = vector.broadcast %cst_31 : f32 to vector<8x32xf32>
    %81 = arith.subf %80, %73 : vector<8x32xf32>
    %82 = arith.mulf %81, %79 : vector<8x32xf32>
    %83 = arith.mulf %73, %51 : vector<8x32xf32>
    %84 = arith.addf %82, %83 : vector<8x32xf32>
    %85 = arith.truncf %84 : vector<8x32xf32> to vector<8x32xbf16>
    %cst_32 = arith.constant dense<0.000000e+00> : vector<8x128xf32>
    %86 = tpu.matmul %85, %1, %cst_32 {dimension_numbers = #tpu.dot_dimension_numbers<[1], [0], [0], [1], [0, 0, 1, 1], [], []>} : vector<8x32xbf16>, vector<32x128xbf16>, vector<8x128xf32> -> vector<8x128xf32>
    %87 = vector.extract_strided_slice %86 {offsets = [0, 0], sizes = [8, 32], strides = [1, 1]} : vector<8x128xf32> to vector<8x32xf32>
    %88 = arith.addf %87, %14 : vector<8x32xf32>
    %89 = vector.extract_strided_slice %86 {offsets = [0, 32], sizes = [8, 96], strides = [1, 1]} : vector<8x128xf32> to vector<8x96xf32>
    %c0_33 = arith.constant 0 : index
    %c32 = arith.constant 32 : index
    %90 = vector.load %arg11[%c0_33, %c32] : memref<8x256xf32, #tpu.memory_space<vmem>>, vector<8x32xf32>
    tpu.vector_store %arg11[%c0_33, %c32], %88 {strides = array<i32>} : memref<8x256xf32, #tpu.memory_space<vmem>>, vector<8x32xf32>,
    %c1 = arith.constant 1 : index
    %91 = memref.load %arg0[%c1] : memref<8xi32, #tpu.memory_space<smem>>
    %c0_i32_34 = arith.constant 0 : i32
    %92 = arith.cmpi ne, %91, %c0_i32_34 : i32
    %93 = arith.extui %92 : i1 to i32
    %c0_i32_35 = arith.constant 0 : i32
    %94 = arith.cmpi ne, %93, %c0_i32_35 : i32
    %95 = scf.if %94 -> (vector<8x96xf32>) {
      %c8 = arith.constant 8 : index
      %c0_70 = arith.constant 0 : index
      %288 = vector.load %arg12[%c8, %c0_70] : memref<64x96xf32, #tpu.memory_space<vmem>>, vector<8x96xf32>
      scf.yield %288 : vector<8x96xf32>
    } else {
      %cst_70 = arith.constant dense<0xFF800000> : vector<8xf32>
      %288 = vector.multi_reduction <maximumf>, %88, %cst_70 [1] : vector<8x32xf32> to vector<8xf32>
      %289 = vector.shape_cast %288 : vector<8xf32> to vector<8x1xf32>
      %290 = vector.broadcast %289 : vector<8x1xf32> to vector<8x32xf32>
      %291 = arith.cmpf oge, %88, %290 : vector<8x32xf32>
      %c32_i32 = arith.constant 32 : i32
      %292 = vector.broadcast %c32_i32 : i32 to vector<8x32xi32>
      %293 = arith.select %291, %26, %292 : vector<8x32xi1>, vector<8x32xi32>
      %cst_71 = arith.constant dense<2147483647> : vector<8xi32>
      %294 = vector.multi_reduction <minsi>, %293, %cst_71 [1] : vector<8x32xi32> to vector<8xi32>
      %295 = vector.shape_cast %294 : vector<8xi32> to vector<8x1xi32>
      %296 = vector.broadcast %295 : vector<8x1xi32> to vector<8x32xi32>
      %297 = arith.cmpi eq, %26, %296 : vector<8x32xi32>
      %298 = arith.extui %297 : vector<8x32xi1> to vector<8x32xi32>
      %299 = arith.sitofp %298 : vector<8x32xi32> to vector<8x32xf32>
      %300 = arith.truncf %299 : vector<8x32xf32> to vector<8x32xbf16>
      %c0_72 = arith.constant 0 : index
      %c0_73 = arith.constant 0 : index
      %301 = vector.load %arg8[%c0_72, %c0_73] : memref<32x96xbf16, #tpu.memory_space<vmem>>, vector<32x96xbf16>
      %cst_74 = arith.constant dense<0.000000e+00> : vector<8x96xf32>
      %302 = tpu.matmul %300, %301, %cst_74 {dimension_numbers = #tpu.dot_dimension_numbers<[1], [0], [0], [1], [0, 0, 1, 1], [], []>} : vector<8x32xbf16>, vector<32x96xbf16>, vector<8x96xf32> -> vector<8x96xf32>
      scf.yield %302 : vector<8x96xf32>
    }
    %96 = arith.addf %10, %95 : vector<8x96xf32>
    %97 = vector.extract_strided_slice %96 {offsets = [0, 0], sizes = [8, 64], strides = [1, 1]} : vector<8x96xf32> to vector<8x64xf32>
    %98 = vector.extract_strided_slice %89 {offsets = [0, 0], sizes = [8, 64], strides = [1, 1]} : vector<8x96xf32> to vector<8x64xf32>
    %99 = arith.addf %97, %98 : vector<8x64xf32>
    %100 = arith.negf %99 : vector<8x64xf32>
    %101 = math.exp %100 : vector<8x64xf32>
    %cst_36 = arith.constant 1.000000e+00 : f32
    %102 = vector.broadcast %cst_36 : f32 to vector<8x64xf32>
    %103 = arith.addf %102, %101 : vector<8x64xf32>
    %104 = arith.divf %102, %103 : vector<8x64xf32>
    %105 = vector.extract_strided_slice %104 {offsets = [0, 0], sizes = [8, 32], strides = [1, 1]} : vector<8x64xf32> to vector<8x32xf32>
    %106 = vector.extract_strided_slice %104 {offsets = [0, 32], sizes = [8, 32], strides = [1, 1]} : vector<8x64xf32> to vector<8x32xf32>
    %107 = vector.extract_strided_slice %96 {offsets = [0, 64], sizes = [8, 32], strides = [1, 1]} : vector<8x96xf32> to vector<8x32xf32>
    %108 = vector.extract_strided_slice %89 {offsets = [0, 64], sizes = [8, 32], strides = [1, 1]} : vector<8x96xf32> to vector<8x32xf32>
    %109 = arith.addf %108, %4 : vector<8x32xf32>
    %110 = arith.mulf %105, %109 : vector<8x32xf32>
    %111 = arith.addf %107, %110 : vector<8x32xf32>
    %112 = math.tanh %111 : vector<8x32xf32>
    %cst_37 = arith.constant 1.000000e+00 : f32
    %113 = vector.broadcast %cst_37 : f32 to vector<8x32xf32>
    %114 = arith.subf %113, %106 : vector<8x32xf32>
    %115 = arith.mulf %114, %112 : vector<8x32xf32>
    %116 = arith.mulf %106, %84 : vector<8x32xf32>
    %117 = arith.addf %115, %116 : vector<8x32xf32>
    %118 = arith.truncf %117 : vector<8x32xf32> to vector<8x32xbf16>
    %cst_38 = arith.constant dense<0.000000e+00> : vector<8x128xf32>
    %119 = tpu.matmul %118, %1, %cst_38 {dimension_numbers = #tpu.dot_dimension_numbers<[1], [0], [0], [1], [0, 0, 1, 1], [], []>} : vector<8x32xbf16>, vector<32x128xbf16>, vector<8x128xf32> -> vector<8x128xf32>
    %120 = vector.extract_strided_slice %119 {offsets = [0, 0], sizes = [8, 32], strides = [1, 1]} : vector<8x128xf32> to vector<8x32xf32>
    %121 = arith.addf %120, %14 : vector<8x32xf32>
    %122 = vector.extract_strided_slice %119 {offsets = [0, 32], sizes = [8, 96], strides = [1, 1]} : vector<8x128xf32> to vector<8x96xf32>
    %c0_39 = arith.constant 0 : index
    %c64 = arith.constant 64 : index
    %123 = vector.load %arg11[%c0_39, %c64] : memref<8x256xf32, #tpu.memory_space<vmem>>, vector<8x32xf32>
    tpu.vector_store %arg11[%c0_39, %c64], %121 {strides = array<i32>} : memref<8x256xf32, #tpu.memory_space<vmem>>, vector<8x32xf32>,
    %c2 = arith.constant 2 : index
    %124 = memref.load %arg0[%c2] : memref<8xi32, #tpu.memory_space<smem>>
    %c0_i32_40 = arith.constant 0 : i32
    %125 = arith.cmpi ne, %124, %c0_i32_40 : i32
    %126 = arith.extui %125 : i1 to i32
    %c0_i32_41 = arith.constant 0 : i32
    %127 = arith.cmpi ne, %126, %c0_i32_41 : i32
    %128 = scf.if %127 -> (vector<8x96xf32>) {
      %c16 = arith.constant 16 : index
      %c0_70 = arith.constant 0 : index
      %288 = vector.load %arg12[%c16, %c0_70] : memref<64x96xf32, #tpu.memory_space<vmem>>, vector<8x96xf32>
      scf.yield %288 : vector<8x96xf32>
    } else {
      %cst_70 = arith.constant dense<0xFF800000> : vector<8xf32>
      %288 = vector.multi_reduction <maximumf>, %121, %cst_70 [1] : vector<8x32xf32> to vector<8xf32>
      %289 = vector.shape_cast %288 : vector<8xf32> to vector<8x1xf32>
      %290 = vector.broadcast %289 : vector<8x1xf32> to vector<8x32xf32>
      %291 = arith.cmpf oge, %121, %290 : vector<8x32xf32>
      %c32_i32 = arith.constant 32 : i32
      %292 = vector.broadcast %c32_i32 : i32 to vector<8x32xi32>
      %293 = arith.select %291, %26, %292 : vector<8x32xi1>, vector<8x32xi32>
      %cst_71 = arith.constant dense<2147483647> : vector<8xi32>
      %294 = vector.multi_reduction <minsi>, %293, %cst_71 [1] : vector<8x32xi32> to vector<8xi32>
      %295 = vector.shape_cast %294 : vector<8xi32> to vector<8x1xi32>
      %296 = vector.broadcast %295 : vector<8x1xi32> to vector<8x32xi32>
      %297 = arith.cmpi eq, %26, %296 : vector<8x32xi32>
      %298 = arith.extui %297 : vector<8x32xi1> to vector<8x32xi32>
      %299 = arith.sitofp %298 : vector<8x32xi32> to vector<8x32xf32>
      %300 = arith.truncf %299 : vector<8x32xf32> to vector<8x32xbf16>
      %c0_72 = arith.constant 0 : index
      %c0_73 = arith.constant 0 : index
      %301 = vector.load %arg8[%c0_72, %c0_73] : memref<32x96xbf16, #tpu.memory_space<vmem>>, vector<32x96xbf16>
      %cst_74 = arith.constant dense<0.000000e+00> : vector<8x96xf32>
      %302 = tpu.matmul %300, %301, %cst_74 {dimension_numbers = #tpu.dot_dimension_numbers<[1], [0], [0], [1], [0, 0, 1, 1], [], []>} : vector<8x32xbf16>, vector<32x96xbf16>, vector<8x96xf32> -> vector<8x96xf32>
      scf.yield %302 : vector<8x96xf32>
    }
    %129 = arith.addf %10, %128 : vector<8x96xf32>
    %130 = vector.extract_strided_slice %129 {offsets = [0, 0], sizes = [8, 64], strides = [1, 1]} : vector<8x96xf32> to vector<8x64xf32>
    %131 = vector.extract_strided_slice %122 {offsets = [0, 0], sizes = [8, 64], strides = [1, 1]} : vector<8x96xf32> to vector<8x64xf32>
    %132 = arith.addf %130, %131 : vector<8x64xf32>
    %133 = arith.negf %132 : vector<8x64xf32>
    %134 = math.exp %133 : vector<8x64xf32>
    %cst_42 = arith.constant 1.000000e+00 : f32
    %135 = vector.broadcast %cst_42 : f32 to vector<8x64xf32>
    %136 = arith.addf %135, %134 : vector<8x64xf32>
    %137 = arith.divf %135, %136 : vector<8x64xf32>
    %138 = vector.extract_strided_slice %137 {offsets = [0, 0], sizes = [8, 32], strides = [1, 1]} : vector<8x64xf32> to vector<8x32xf32>
    %139 = vector.extract_strided_slice %137 {offsets = [0, 32], sizes = [8, 32], strides = [1, 1]} : vector<8x64xf32> to vector<8x32xf32>
    %140 = vector.extract_strided_slice %129 {offsets = [0, 64], sizes = [8, 32], strides = [1, 1]} : vector<8x96xf32> to vector<8x32xf32>
    %141 = vector.extract_strided_slice %122 {offsets = [0, 64], sizes = [8, 32], strides = [1, 1]} : vector<8x96xf32> to vector<8x32xf32>
    %142 = arith.addf %141, %4 : vector<8x32xf32>
    %143 = arith.mulf %138, %142 : vector<8x32xf32>
    %144 = arith.addf %140, %143 : vector<8x32xf32>
    %145 = math.tanh %144 : vector<8x32xf32>
    %cst_43 = arith.constant 1.000000e+00 : f32
    %146 = vector.broadcast %cst_43 : f32 to vector<8x32xf32>
    %147 = arith.subf %146, %139 : vector<8x32xf32>
    %148 = arith.mulf %147, %145 : vector<8x32xf32>
    %149 = arith.mulf %139, %117 : vector<8x32xf32>
    %150 = arith.addf %148, %149 : vector<8x32xf32>
    %151 = arith.truncf %150 : vector<8x32xf32> to vector<8x32xbf16>
    %cst_44 = arith.constant dense<0.000000e+00> : vector<8x128xf32>
    %152 = tpu.matmul %151, %1, %cst_44 {dimension_numbers = #tpu.dot_dimension_numbers<[1], [0], [0], [1], [0, 0, 1, 1], [], []>} : vector<8x32xbf16>, vector<32x128xbf16>, vector<8x128xf32> -> vector<8x128xf32>
    %153 = vector.extract_strided_slice %152 {offsets = [0, 0], sizes = [8, 32], strides = [1, 1]} : vector<8x128xf32> to vector<8x32xf32>
    %154 = arith.addf %153, %14 : vector<8x32xf32>
    %155 = vector.extract_strided_slice %152 {offsets = [0, 32], sizes = [8, 96], strides = [1, 1]} : vector<8x128xf32> to vector<8x96xf32>
    %c0_45 = arith.constant 0 : index
    %c96 = arith.constant 96 : index
    %156 = vector.load %arg11[%c0_45, %c96] : memref<8x256xf32, #tpu.memory_space<vmem>>, vector<8x32xf32>
    tpu.vector_store %arg11[%c0_45, %c96], %154 {strides = array<i32>} : memref<8x256xf32, #tpu.memory_space<vmem>>, vector<8x32xf32>,
    %c3 = arith.constant 3 : index
    %157 = memref.load %arg0[%c3] : memref<8xi32, #tpu.memory_space<smem>>
    %c0_i32_46 = arith.constant 0 : i32
    %158 = arith.cmpi ne, %157, %c0_i32_46 : i32
    %159 = arith.extui %158 : i1 to i32
    %c0_i32_47 = arith.constant 0 : i32
    %160 = arith.cmpi ne, %159, %c0_i32_47 : i32
    %161 = scf.if %160 -> (vector<8x96xf32>) {
      %c24 = arith.constant 24 : index
      %c0_70 = arith.constant 0 : index
      %288 = vector.load %arg12[%c24, %c0_70] : memref<64x96xf32, #tpu.memory_space<vmem>>, vector<8x96xf32>
      scf.yield %288 : vector<8x96xf32>
    } else {
      %cst_70 = arith.constant dense<0xFF800000> : vector<8xf32>
      %288 = vector.multi_reduction <maximumf>, %154, %cst_70 [1] : vector<8x32xf32> to vector<8xf32>
      %289 = vector.shape_cast %288 : vector<8xf32> to vector<8x1xf32>
      %290 = vector.broadcast %289 : vector<8x1xf32> to vector<8x32xf32>
      %291 = arith.cmpf oge, %154, %290 : vector<8x32xf32>
      %c32_i32 = arith.constant 32 : i32
      %292 = vector.broadcast %c32_i32 : i32 to vector<8x32xi32>
      %293 = arith.select %291, %26, %292 : vector<8x32xi1>, vector<8x32xi32>
      %cst_71 = arith.constant dense<2147483647> : vector<8xi32>
      %294 = vector.multi_reduction <minsi>, %293, %cst_71 [1] : vector<8x32xi32> to vector<8xi32>
      %295 = vector.shape_cast %294 : vector<8xi32> to vector<8x1xi32>
      %296 = vector.broadcast %295 : vector<8x1xi32> to vector<8x32xi32>
      %297 = arith.cmpi eq, %26, %296 : vector<8x32xi32>
      %298 = arith.extui %297 : vector<8x32xi1> to vector<8x32xi32>
      %299 = arith.sitofp %298 : vector<8x32xi32> to vector<8x32xf32>
      %300 = arith.truncf %299 : vector<8x32xf32> to vector<8x32xbf16>
      %c0_72 = arith.constant 0 : index
      %c0_73 = arith.constant 0 : index
      %301 = vector.load %arg8[%c0_72, %c0_73] : memref<32x96xbf16, #tpu.memory_space<vmem>>, vector<32x96xbf16>
      %cst_74 = arith.constant dense<0.000000e+00> : vector<8x96xf32>
      %302 = tpu.matmul %300, %301, %cst_74 {dimension_numbers = #tpu.dot_dimension_numbers<[1], [0], [0], [1], [0, 0, 1, 1], [], []>} : vector<8x32xbf16>, vector<32x96xbf16>, vector<8x96xf32> -> vector<8x96xf32>
      scf.yield %302 : vector<8x96xf32>
    }
    %162 = arith.addf %10, %161 : vector<8x96xf32>
    %163 = vector.extract_strided_slice %162 {offsets = [0, 0], sizes = [8, 64], strides = [1, 1]} : vector<8x96xf32> to vector<8x64xf32>
    %164 = vector.extract_strided_slice %155 {offsets = [0, 0], sizes = [8, 64], strides = [1, 1]} : vector<8x96xf32> to vector<8x64xf32>
    %165 = arith.addf %163, %164 : vector<8x64xf32>
    %166 = arith.negf %165 : vector<8x64xf32>
    %167 = math.exp %166 : vector<8x64xf32>
    %cst_48 = arith.constant 1.000000e+00 : f32
    %168 = vector.broadcast %cst_48 : f32 to vector<8x64xf32>
    %169 = arith.addf %168, %167 : vector<8x64xf32>
    %170 = arith.divf %168, %169 : vector<8x64xf32>
    %171 = vector.extract_strided_slice %170 {offsets = [0, 0], sizes = [8, 32], strides = [1, 1]} : vector<8x64xf32> to vector<8x32xf32>
    %172 = vector.extract_strided_slice %170 {offsets = [0, 32], sizes = [8, 32], strides = [1, 1]} : vector<8x64xf32> to vector<8x32xf32>
    %173 = vector.extract_strided_slice %162 {offsets = [0, 64], sizes = [8, 32], strides = [1, 1]} : vector<8x96xf32> to vector<8x32xf32>
    %174 = vector.extract_strided_slice %155 {offsets = [0, 64], sizes = [8, 32], strides = [1, 1]} : vector<8x96xf32> to vector<8x32xf32>
    %175 = arith.addf %174, %4 : vector<8x32xf32>
    %176 = arith.mulf %171, %175 : vector<8x32xf32>
    %177 = arith.addf %173, %176 : vector<8x32xf32>
    %178 = math.tanh %177 : vector<8x32xf32>
    %cst_49 = arith.constant 1.000000e+00 : f32
    %179 = vector.broadcast %cst_49 : f32 to vector<8x32xf32>
    %180 = arith.subf %179, %172 : vector<8x32xf32>
    %181 = arith.mulf %180, %178 : vector<8x32xf32>
    %182 = arith.mulf %172, %150 : vector<8x32xf32>
    %183 = arith.addf %181, %182 : vector<8x32xf32>
    %184 = arith.truncf %183 : vector<8x32xf32> to vector<8x32xbf16>
    %cst_50 = arith.constant dense<0.000000e+00> : vector<8x128xf32>
    %185 = tpu.matmul %184, %1, %cst_50 {dimension_numbers = #tpu.dot_dimension_numbers<[1], [0], [0], [1], [0, 0, 1, 1], [], []>} : vector<8x32xbf16>, vector<32x128xbf16>, vector<8x128xf32> -> vector<8x128xf32>
    %186 = vector.extract_strided_slice %185 {offsets = [0, 0], sizes = [8, 32], strides = [1, 1]} : vector<8x128xf32> to vector<8x32xf32>
    %187 = arith.addf %186, %14 : vector<8x32xf32>
    %188 = vector.extract_strided_slice %185 {offsets = [0, 32], sizes = [8, 96], strides = [1, 1]} : vector<8x128xf32> to vector<8x96xf32>
    %c0_51 = arith.constant 0 : index
    %c128 = arith.constant 128 : index
    %189 = vector.load %arg11[%c0_51, %c128] : memref<8x256xf32, #tpu.memory_space<vmem>>, vector<8x32xf32>
    tpu.vector_store %arg11[%c0_51, %c128], %187 {strides = array<i32>} : memref<8x256xf32, #tpu.memory_space<vmem>>, vector<8x32xf32>,
    %c4 = arith.constant 4 : index
    %190 = memref.load %arg0[%c4] : memref<8xi32, #tpu.memory_space<smem>>
    %c0_i32_52 = arith.constant 0 : i32
    %191 = arith.cmpi ne, %190, %c0_i32_52 : i32
    %192 = arith.extui %191 : i1 to i32
    %c0_i32_53 = arith.constant 0 : i32
    %193 = arith.cmpi ne, %192, %c0_i32_53 : i32
    %194 = scf.if %193 -> (vector<8x96xf32>) {
      %c32_70 = arith.constant 32 : index
      %c0_71 = arith.constant 0 : index
      %288 = vector.load %arg12[%c32_70, %c0_71] : memref<64x96xf32, #tpu.memory_space<vmem>>, vector<8x96xf32>
      scf.yield %288 : vector<8x96xf32>
    } else {
      %cst_70 = arith.constant dense<0xFF800000> : vector<8xf32>
      %288 = vector.multi_reduction <maximumf>, %187, %cst_70 [1] : vector<8x32xf32> to vector<8xf32>
      %289 = vector.shape_cast %288 : vector<8xf32> to vector<8x1xf32>
      %290 = vector.broadcast %289 : vector<8x1xf32> to vector<8x32xf32>
      %291 = arith.cmpf oge, %187, %290 : vector<8x32xf32>
      %c32_i32 = arith.constant 32 : i32
      %292 = vector.broadcast %c32_i32 : i32 to vector<8x32xi32>
      %293 = arith.select %291, %26, %292 : vector<8x32xi1>, vector<8x32xi32>
      %cst_71 = arith.constant dense<2147483647> : vector<8xi32>
      %294 = vector.multi_reduction <minsi>, %293, %cst_71 [1] : vector<8x32xi32> to vector<8xi32>
      %295 = vector.shape_cast %294 : vector<8xi32> to vector<8x1xi32>
      %296 = vector.broadcast %295 : vector<8x1xi32> to vector<8x32xi32>
      %297 = arith.cmpi eq, %26, %296 : vector<8x32xi32>
      %298 = arith.extui %297 : vector<8x32xi1> to vector<8x32xi32>
      %299 = arith.sitofp %298 : vector<8x32xi32> to vector<8x32xf32>
      %300 = arith.truncf %299 : vector<8x32xf32> to vector<8x32xbf16>
      %c0_72 = arith.constant 0 : index
      %c0_73 = arith.constant 0 : index
      %301 = vector.load %arg8[%c0_72, %c0_73] : memref<32x96xbf16, #tpu.memory_space<vmem>>, vector<32x96xbf16>
      %cst_74 = arith.constant dense<0.000000e+00> : vector<8x96xf32>
      %302 = tpu.matmul %300, %301, %cst_74 {dimension_numbers = #tpu.dot_dimension_numbers<[1], [0], [0], [1], [0, 0, 1, 1], [], []>} : vector<8x32xbf16>, vector<32x96xbf16>, vector<8x96xf32> -> vector<8x96xf32>
      scf.yield %302 : vector<8x96xf32>
    }
    %195 = arith.addf %10, %194 : vector<8x96xf32>
    %196 = vector.extract_strided_slice %195 {offsets = [0, 0], sizes = [8, 64], strides = [1, 1]} : vector<8x96xf32> to vector<8x64xf32>
    %197 = vector.extract_strided_slice %188 {offsets = [0, 0], sizes = [8, 64], strides = [1, 1]} : vector<8x96xf32> to vector<8x64xf32>
    %198 = arith.addf %196, %197 : vector<8x64xf32>
    %199 = arith.negf %198 : vector<8x64xf32>
    %200 = math.exp %199 : vector<8x64xf32>
    %cst_54 = arith.constant 1.000000e+00 : f32
    %201 = vector.broadcast %cst_54 : f32 to vector<8x64xf32>
    %202 = arith.addf %201, %200 : vector<8x64xf32>
    %203 = arith.divf %201, %202 : vector<8x64xf32>
    %204 = vector.extract_strided_slice %203 {offsets = [0, 0], sizes = [8, 32], strides = [1, 1]} : vector<8x64xf32> to vector<8x32xf32>
    %205 = vector.extract_strided_slice %203 {offsets = [0, 32], sizes = [8, 32], strides = [1, 1]} : vector<8x64xf32> to vector<8x32xf32>
    %206 = vector.extract_strided_slice %195 {offsets = [0, 64], sizes = [8, 32], strides = [1, 1]} : vector<8x96xf32> to vector<8x32xf32>
    %207 = vector.extract_strided_slice %188 {offsets = [0, 64], sizes = [8, 32], strides = [1, 1]} : vector<8x96xf32> to vector<8x32xf32>
    %208 = arith.addf %207, %4 : vector<8x32xf32>
    %209 = arith.mulf %204, %208 : vector<8x32xf32>
    %210 = arith.addf %206, %209 : vector<8x32xf32>
    %211 = math.tanh %210 : vector<8x32xf32>
    %cst_55 = arith.constant 1.000000e+00 : f32
    %212 = vector.broadcast %cst_55 : f32 to vector<8x32xf32>
    %213 = arith.subf %212, %205 : vector<8x32xf32>
    %214 = arith.mulf %213, %211 : vector<8x32xf32>
    %215 = arith.mulf %205, %183 : vector<8x32xf32>
    %216 = arith.addf %214, %215 : vector<8x32xf32>
    %217 = arith.truncf %216 : vector<8x32xf32> to vector<8x32xbf16>
    %cst_56 = arith.constant dense<0.000000e+00> : vector<8x128xf32>
    %218 = tpu.matmul %217, %1, %cst_56 {dimension_numbers = #tpu.dot_dimension_numbers<[1], [0], [0], [1], [0, 0, 1, 1], [], []>} : vector<8x32xbf16>, vector<32x128xbf16>, vector<8x128xf32> -> vector<8x128xf32>
    %219 = vector.extract_strided_slice %218 {offsets = [0, 0], sizes = [8, 32], strides = [1, 1]} : vector<8x128xf32> to vector<8x32xf32>
    %220 = arith.addf %219, %14 : vector<8x32xf32>
    %221 = vector.extract_strided_slice %218 {offsets = [0, 32], sizes = [8, 96], strides = [1, 1]} : vector<8x128xf32> to vector<8x96xf32>
    %c0_57 = arith.constant 0 : index
    %c160 = arith.constant 160 : index
    %222 = vector.load %arg11[%c0_57, %c160] : memref<8x256xf32, #tpu.memory_space<vmem>>, vector<8x32xf32>
    tpu.vector_store %arg11[%c0_57, %c160], %220 {strides = array<i32>} : memref<8x256xf32, #tpu.memory_space<vmem>>, vector<8x32xf32>,
    %c5 = arith.constant 5 : index
    %223 = memref.load %arg0[%c5] : memref<8xi32, #tpu.memory_space<smem>>
    %c0_i32_58 = arith.constant 0 : i32
    %224 = arith.cmpi ne, %223, %c0_i32_58 : i32
    %225 = arith.extui %224 : i1 to i32
    %c0_i32_59 = arith.constant 0 : i32
    %226 = arith.cmpi ne, %225, %c0_i32_59 : i32
    %227 = scf.if %226 -> (vector<8x96xf32>) {
      %c40 = arith.constant 40 : index
      %c0_70 = arith.constant 0 : index
      %288 = vector.load %arg12[%c40, %c0_70] : memref<64x96xf32, #tpu.memory_space<vmem>>, vector<8x96xf32>
      scf.yield %288 : vector<8x96xf32>
    } else {
      %cst_70 = arith.constant dense<0xFF800000> : vector<8xf32>
      %288 = vector.multi_reduction <maximumf>, %220, %cst_70 [1] : vector<8x32xf32> to vector<8xf32>
      %289 = vector.shape_cast %288 : vector<8xf32> to vector<8x1xf32>
      %290 = vector.broadcast %289 : vector<8x1xf32> to vector<8x32xf32>
      %291 = arith.cmpf oge, %220, %290 : vector<8x32xf32>
      %c32_i32 = arith.constant 32 : i32
      %292 = vector.broadcast %c32_i32 : i32 to vector<8x32xi32>
      %293 = arith.select %291, %26, %292 : vector<8x32xi1>, vector<8x32xi32>
      %cst_71 = arith.constant dense<2147483647> : vector<8xi32>
      %294 = vector.multi_reduction <minsi>, %293, %cst_71 [1] : vector<8x32xi32> to vector<8xi32>
      %295 = vector.shape_cast %294 : vector<8xi32> to vector<8x1xi32>
      %296 = vector.broadcast %295 : vector<8x1xi32> to vector<8x32xi32>
      %297 = arith.cmpi eq, %26, %296 : vector<8x32xi32>
      %298 = arith.extui %297 : vector<8x32xi1> to vector<8x32xi32>
      %299 = arith.sitofp %298 : vector<8x32xi32> to vector<8x32xf32>
      %300 = arith.truncf %299 : vector<8x32xf32> to vector<8x32xbf16>
      %c0_72 = arith.constant 0 : index
      %c0_73 = arith.constant 0 : index
      %301 = vector.load %arg8[%c0_72, %c0_73] : memref<32x96xbf16, #tpu.memory_space<vmem>>, vector<32x96xbf16>
      %cst_74 = arith.constant dense<0.000000e+00> : vector<8x96xf32>
      %302 = tpu.matmul %300, %301, %cst_74 {dimension_numbers = #tpu.dot_dimension_numbers<[1], [0], [0], [1], [0, 0, 1, 1], [], []>} : vector<8x32xbf16>, vector<32x96xbf16>, vector<8x96xf32> -> vector<8x96xf32>
      scf.yield %302 : vector<8x96xf32>
    }
    %228 = arith.addf %10, %227 : vector<8x96xf32>
    %229 = vector.extract_strided_slice %228 {offsets = [0, 0], sizes = [8, 64], strides = [1, 1]} : vector<8x96xf32> to vector<8x64xf32>
    %230 = vector.extract_strided_slice %221 {offsets = [0, 0], sizes = [8, 64], strides = [1, 1]} : vector<8x96xf32> to vector<8x64xf32>
    %231 = arith.addf %229, %230 : vector<8x64xf32>
    %232 = arith.negf %231 : vector<8x64xf32>
    %233 = math.exp %232 : vector<8x64xf32>
    %cst_60 = arith.constant 1.000000e+00 : f32
    %234 = vector.broadcast %cst_60 : f32 to vector<8x64xf32>
    %235 = arith.addf %234, %233 : vector<8x64xf32>
    %236 = arith.divf %234, %235 : vector<8x64xf32>
    %237 = vector.extract_strided_slice %236 {offsets = [0, 0], sizes = [8, 32], strides = [1, 1]} : vector<8x64xf32> to vector<8x32xf32>
    %238 = vector.extract_strided_slice %236 {offsets = [0, 32], sizes = [8, 32], strides = [1, 1]} : vector<8x64xf32> to vector<8x32xf32>
    %239 = vector.extract_strided_slice %228 {offsets = [0, 64], sizes = [8, 32], strides = [1, 1]} : vector<8x96xf32> to vector<8x32xf32>
    %240 = vector.extract_strided_slice %221 {offsets = [0, 64], sizes = [8, 32], strides = [1, 1]} : vector<8x96xf32> to vector<8x32xf32>
    %241 = arith.addf %240, %4 : vector<8x32xf32>
    %242 = arith.mulf %237, %241 : vector<8x32xf32>
    %243 = arith.addf %239, %242 : vector<8x32xf32>
    %244 = math.tanh %243 : vector<8x32xf32>
    %cst_61 = arith.constant 1.000000e+00 : f32
    %245 = vector.broadcast %cst_61 : f32 to vector<8x32xf32>
    %246 = arith.subf %245, %238 : vector<8x32xf32>
    %247 = arith.mulf %246, %244 : vector<8x32xf32>
    %248 = arith.mulf %238, %216 : vector<8x32xf32>
    %249 = arith.addf %247, %248 : vector<8x32xf32>
    %250 = arith.truncf %249 : vector<8x32xf32> to vector<8x32xbf16>
    %cst_62 = arith.constant dense<0.000000e+00> : vector<8x128xf32>
    %251 = tpu.matmul %250, %1, %cst_62 {dimension_numbers = #tpu.dot_dimension_numbers<[1], [0], [0], [1], [0, 0, 1, 1], [], []>} : vector<8x32xbf16>, vector<32x128xbf16>, vector<8x128xf32> -> vector<8x128xf32>
    %252 = vector.extract_strided_slice %251 {offsets = [0, 0], sizes = [8, 32], strides = [1, 1]} : vector<8x128xf32> to vector<8x32xf32>
    %253 = arith.addf %252, %14 : vector<8x32xf32>
    %254 = vector.extract_strided_slice %251 {offsets = [0, 32], sizes = [8, 96], strides = [1, 1]} : vector<8x128xf32> to vector<8x96xf32>
    %c0_63 = arith.constant 0 : index
    %c192 = arith.constant 192 : index
    %255 = vector.load %arg11[%c0_63, %c192] : memref<8x256xf32, #tpu.memory_space<vmem>>, vector<8x32xf32>
    tpu.vector_store %arg11[%c0_63, %c192], %253 {strides = array<i32>} : memref<8x256xf32, #tpu.memory_space<vmem>>, vector<8x32xf32>,
    %c6 = arith.constant 6 : index
    %256 = memref.load %arg0[%c6] : memref<8xi32, #tpu.memory_space<smem>>
    %c0_i32_64 = arith.constant 0 : i32
    %257 = arith.cmpi ne, %256, %c0_i32_64 : i32
    %258 = arith.extui %257 : i1 to i32
    %c0_i32_65 = arith.constant 0 : i32
    %259 = arith.cmpi ne, %258, %c0_i32_65 : i32
    %260 = scf.if %259 -> (vector<8x96xf32>) {
      %c48 = arith.constant 48 : index
      %c0_70 = arith.constant 0 : index
      %288 = vector.load %arg12[%c48, %c0_70] : memref<64x96xf32, #tpu.memory_space<vmem>>, vector<8x96xf32>
      scf.yield %288 : vector<8x96xf32>
    } else {
      %cst_70 = arith.constant dense<0xFF800000> : vector<8xf32>
      %288 = vector.multi_reduction <maximumf>, %253, %cst_70 [1] : vector<8x32xf32> to vector<8xf32>
      %289 = vector.shape_cast %288 : vector<8xf32> to vector<8x1xf32>
      %290 = vector.broadcast %289 : vector<8x1xf32> to vector<8x32xf32>
      %291 = arith.cmpf oge, %253, %290 : vector<8x32xf32>
      %c32_i32 = arith.constant 32 : i32
      %292 = vector.broadcast %c32_i32 : i32 to vector<8x32xi32>
      %293 = arith.select %291, %26, %292 : vector<8x32xi1>, vector<8x32xi32>
      %cst_71 = arith.constant dense<2147483647> : vector<8xi32>
      %294 = vector.multi_reduction <minsi>, %293, %cst_71 [1] : vector<8x32xi32> to vector<8xi32>
      %295 = vector.shape_cast %294 : vector<8xi32> to vector<8x1xi32>
      %296 = vector.broadcast %295 : vector<8x1xi32> to vector<8x32xi32>
      %297 = arith.cmpi eq, %26, %296 : vector<8x32xi32>
      %298 = arith.extui %297 : vector<8x32xi1> to vector<8x32xi32>
      %299 = arith.sitofp %298 : vector<8x32xi32> to vector<8x32xf32>
      %300 = arith.truncf %299 : vector<8x32xf32> to vector<8x32xbf16>
      %c0_72 = arith.constant 0 : index
      %c0_73 = arith.constant 0 : index
      %301 = vector.load %arg8[%c0_72, %c0_73] : memref<32x96xbf16, #tpu.memory_space<vmem>>, vector<32x96xbf16>
      %cst_74 = arith.constant dense<0.000000e+00> : vector<8x96xf32>
      %302 = tpu.matmul %300, %301, %cst_74 {dimension_numbers = #tpu.dot_dimension_numbers<[1], [0], [0], [1], [0, 0, 1, 1], [], []>} : vector<8x32xbf16>, vector<32x96xbf16>, vector<8x96xf32> -> vector<8x96xf32>
      scf.yield %302 : vector<8x96xf32>
    }
    %261 = arith.addf %10, %260 : vector<8x96xf32>
    %262 = vector.extract_strided_slice %261 {offsets = [0, 0], sizes = [8, 64], strides = [1, 1]} : vector<8x96xf32> to vector<8x64xf32>
    %263 = vector.extract_strided_slice %254 {offsets = [0, 0], sizes = [8, 64], strides = [1, 1]} : vector<8x96xf32> to vector<8x64xf32>
    %264 = arith.addf %262, %263 : vector<8x64xf32>
    %265 = arith.negf %264 : vector<8x64xf32>
    %266 = math.exp %265 : vector<8x64xf32>
    %cst_66 = arith.constant 1.000000e+00 : f32
    %267 = vector.broadcast %cst_66 : f32 to vector<8x64xf32>
    %268 = arith.addf %267, %266 : vector<8x64xf32>
    %269 = arith.divf %267, %268 : vector<8x64xf32>
    %270 = vector.extract_strided_slice %269 {offsets = [0, 0], sizes = [8, 32], strides = [1, 1]} : vector<8x64xf32> to vector<8x32xf32>
    %271 = vector.extract_strided_slice %269 {offsets = [0, 32], sizes = [8, 32], strides = [1, 1]} : vector<8x64xf32> to vector<8x32xf32>
    %272 = vector.extract_strided_slice %261 {offsets = [0, 64], sizes = [8, 32], strides = [1, 1]} : vector<8x96xf32> to vector<8x32xf32>
    %273 = vector.extract_strided_slice %254 {offsets = [0, 64], sizes = [8, 32], strides = [1, 1]} : vector<8x96xf32> to vector<8x32xf32>
    %274 = arith.addf %273, %4 : vector<8x32xf32>
    %275 = arith.mulf %270, %274 : vector<8x32xf32>
    %276 = arith.addf %272, %275 : vector<8x32xf32>
    %277 = math.tanh %276 : vector<8x32xf32>
    %cst_67 = arith.constant 1.000000e+00 : f32
    %278 = vector.broadcast %cst_67 : f32 to vector<8x32xf32>
    %279 = arith.subf %278, %271 : vector<8x32xf32>
    %280 = arith.mulf %279, %277 : vector<8x32xf32>
    %281 = arith.mulf %271, %249 : vector<8x32xf32>
    %282 = arith.addf %280, %281 : vector<8x32xf32>
    %283 = arith.truncf %282 : vector<8x32xf32> to vector<8x32xbf16>
    %cst_68 = arith.constant dense<0.000000e+00> : vector<8x128xf32>
    %284 = tpu.matmul %283, %1, %cst_68 {dimension_numbers = #tpu.dot_dimension_numbers<[1], [0], [0], [1], [0, 0, 1, 1], [], []>} : vector<8x32xbf16>, vector<32x128xbf16>, vector<8x128xf32> -> vector<8x128xf32>
    %285 = vector.extract_strided_slice %284 {offsets = [0, 0], sizes = [8, 32], strides = [1, 1]} : vector<8x128xf32> to vector<8x32xf32>
    %286 = arith.addf %285, %14 : vector<8x32xf32>
    %c0_69 = arith.constant 0 : index
    %c224 = arith.constant 224 : index
    %287 = vector.load %arg11[%c0_69, %c224] : memref<8x256xf32, #tpu.memory_space<vmem>>, vector<8x32xf32>
    tpu.vector_store %arg11[%c0_69, %c224], %286 {strides = array<i32>} : memref<8x256xf32, #tpu.memory_space<vmem>>, vector<8x32xf32>,
    return
  }
}

</mosaic_0001>

<llo_original>
// kernel: eq.1
$region0: #{eq.1}
  %s0 = inlined_call_operand.vmem [shape: s32[8,8], index: 0, kind: input, shape index: {}]
  %s1 = inlined_call_operand.vmem [shape: s32[64], index: 1, kind: output, shape index: {}]
  $region1: #{eq.1} parent=0
    #allocation0 [shape = 'u8[4096]{0}', space=vmem, size = 0x1000, scoped, tag = 'scoped mem for output reshape']
    %v2 = vld [vmem:[%s0] sm:$0x1]
    %vm3 = vcmask 64512
    %4 = vst.msk [vmem:[#allocation0] sm:$0x1] %vm3, %v2
    %s5 = scalar_lea.vmem %s0, 7
    %v6 = vld [vmem:[%s5] sm:$0x1]
    %7 = vrot.lane.b32.xlu0 %v6, 56
    %v8 = vpop.permute.xlu0 %7
    %vm9 = vcmask 523712
    %10 = vst.msk [vmem:[#allocation0] sm:$0x1] %vm9, %v8
    %s11 = scalar_lea.vmem %s0, 6
    %v12 = vld [vmem:[%s11] sm:$0x1]
    %13 = vrot.lane.b32.xlu0 %v12, 48
    %v14 = vpop.permute.xlu0 %13
    %vm15 = vcmask 458112
    %16 = vst.msk [vmem:[#allocation0] sm:$0x1] %vm15, %v14
    %s17 = scalar_lea.vmem %s0, 5
    %v18 = vld [vmem:[%s17] sm:$0x1]
    %19 = vrot.lane.b32.xlu0 %v18, 40
    %v20 = vpop.permute.xlu0 %19
    %vm21 = vcmask 392512
    %22 = vst.msk [vmem:[#allocation0] sm:$0x1] %vm21, %v20
    %s23 = scalar_lea.vmem %s0, 4
    %v24 = vld [vmem:[%s23] sm:$0x1]
    %25 = vrot.lane.b32.xlu0 %v24, 32
    %v26 = vpop.permute.xlu0 %25
    %vm27 = vcmask 326912
    %28 = vst.msk [vmem:[#allocation0] sm:$0x1] %vm27, %v26
    %s29 = scalar_lea.vmem %s0, 3
    %v30 = vld [vmem:[%s29] sm:$0x1]
    %31 = vrot.lane.b32.xlu0 %v30, 24
    %v32 = vpop.permute.xlu0 %31
    %vm33 = vcmask 261312
    %34 = vst.msk [vmem:[#allocation0] sm:$0x1] %vm33, %v32
    %s35 = scalar_lea.vmem %s0, 2
    %v36 = vld [vmem:[%s35] sm:$0x1]
    %37 = vrot.lane.b32.xlu0 %v36, 16
    %v38 = vpop.permute.xlu0 %37
    %vm39 = vcmask 195712
    %40 = vst.msk [vmem:[#allocation0] sm:$0x1] %vm39, %v38
    %s41 = scalar_lea.vmem %s0, 1
    %v42 = vld [vmem:[%s41] sm:$0x1]
    %43 = vrot.lane.b32.xlu0 %v42, 8
    %v44 = vpop.permute.xlu0 %43
    %vm45 = vcmask 130112
    %46 = vst.msk [vmem:[#allocation0] sm:$0x1] %vm45, %v44
    %s48 = sshllo.u32 0, 1
    %v50 = vld [vmem:[#allocation0] sm:%s48]
    %s51 = sshllo.u32 0, 1
    %52 = vst [vmem:[%s1] sm:%s51] %v50

// kernel: decoder_rnn_forward.1
$region0: #{decoder_rnn_forward.1}
  #allocation0 [shape = 'u32[]', space=smem, size = 0x4, offset = 0x4, fixed_abs, tag = 'smem constant byte address 0x4 - core index']
  #allocation1 [shape = 'u32[144,128]{1,0:T(1,128)}', space=vmem, size = 0x12000, scoped, tag = 'internal scratch']
  #allocation2 [shape = 'f32[64,96]{1,0:T(8,128)}', space=vmem, size = 0x8000, scoped, tag = 'scratch operand']
  %s0 = inlined_call_operand.vmem [shape: s32[8], index: 0, kind: input, shape index: {}]
  %s1 = inlined_call_operand.vmem [shape: bf16[64,32], index: 1, kind: input, shape index: {}]
  %s2 = inlined_call_operand.hbm [shape: f32[8,16], index: 2, kind: input, shape index: {}]
  %s3 = inlined_call_operand.vmem [shape: f32[16,160], index: 3, kind: input, shape index: {}]
  %s4 = inlined_call_operand.vmem [shape: f32[1,32], index: 4, kind: input, shape index: {}]
  %s5 = inlined_call_operand.vmem [shape: f32[1,96], index: 5, kind: input, shape index: {}]
  %s6 = inlined_call_operand.vmem [shape: f32[1,32], index: 6, kind: input, shape index: {}]
  %s7 = inlined_call_operand.vmem [shape: f32[1,96], index: 7, kind: input, shape index: {}]
  %s8 = inlined_call_operand.vmem [shape: bf16[32,96], index: 8, kind: input, shape index: {}]
  %s9 = inlined_call_operand.vmem [shape: bf16[32,128], index: 9, kind: input, shape index: {}]
  %s10 = inlined_call_operand.vmem [shape: f32[1,32], index: 10, kind: input, shape index: {}]
  %s11 = inlined_call_operand.vmem [shape: f32[8,256], index: 11, kind: output, shape index: {}]
  %s12 = sld [smem:[#allocation0]]
  $region118: #{decoder_rnn_forward.1} parent=0
    _
  %s14 = ssub.s32 1, %s12
  %s15 = scalar_select 0, %s14, %s12
  $region1: #{decoder_rnn_forward.1} parent=0
    #allocation3 [shape = 'u8[512]{0}', space=smem, size = 0x200, scoped, tag = 'input window, operand 0, single buffered']
    #allocation4 [shape = 's32[1]{0}', space=sflag, size = 0x4, scoped, tag = 'scoped memory for decoder_rnn_forward.1']
    #allocation5 [shape = 's32[1]{0}', space=sflag, size = 0x4, scoped, tag = 'scoped memory for decoder_rnn_forward.1']
    #allocation6 [shape = 'u8[4096]{0}', space=vmem, size = 0x1000, scoped, tag = 'input window, operand 2, single buffered']
    %16 = vsyncpa [#allocation5], 0
    %17 = vsyncpa [#allocation4], 0
    // Predicated region
    $region2: #{decoder_rnn_forward.1} parent=1 // pred_check
      _
    $region3: #{decoder_rnn_forward.1} parent=1 // pred_check_branch
      %19 = sbr.rel (0) target = $region5
    $region4: #{decoder_rnn_forward.1} parent=1 // pred_region
      %s21 = ssub.s32 16, 16
      %22 = vsyncadd [#allocation5], %s21
      %s24 = sshll.u32 %s0, 4
      %s25 = int_to_ptr.vmem [resolvable:$true] %s24
      %27 = dma.vmem_to_smem %s25, 16, [#allocation3], [#allocation5]
    $region5: #{decoder_rnn_forward.1} parent=1 // pred_fallthru
      _
    // Predicated region
    $region6: #{decoder_rnn_forward.1} parent=1 // pred_check
      _
    $region7: #{decoder_rnn_forward.1} parent=1 // pred_check_branch
      %29 = sbr.rel (0) target = $region9
    $region8: #{decoder_rnn_forward.1} parent=1 // pred_region
      _
    $region9: #{decoder_rnn_forward.1} parent=1 // pred_fallthru
      _
    // Predicated region
    $region10: #{decoder_rnn_forward.1} parent=1 // pred_check
      _
    $region11: #{decoder_rnn_forward.1} parent=1 // pred_check_branch
      %31 = sbr.rel (0) target = $region13
    $region12: #{decoder_rnn_forward.1} parent=1 // pred_region
      %s33 = ssub.s32 128, 128
      %34 = vsyncadd [#allocation4], %s33
      %s36 = sshll.u32 [#allocation6], 4
      %s37 = int_to_ptr.vmem [resolvable:$true] %s36
      %39 = dma.hbm_to_vmem [thread:$0]  %s2, 128, %s37, [#allocation4]
    $region13: #{decoder_rnn_forward.1} parent=1 // pred_fallthru
      _
    // Predicated region
    $region14: #{decoder_rnn_forward.1} parent=1 // pred_check
      _
    $region15: #{decoder_rnn_forward.1} parent=1 // pred_check_branch
      %41 = sbr.rel (0) target = $region17
    $region16: #{decoder_rnn_forward.1} parent=1 // pred_region
      _
    $region17: #{decoder_rnn_forward.1} parent=1 // pred_fallthru
      _
    // Predicated region
    $region18: #{decoder_rnn_forward.1} parent=1 // pred_check
      _
    $region19: #{decoder_rnn_forward.1} parent=1 // pred_check_branch
      %43 = sbr.rel (0) target = $region21
    $region20: #{decoder_rnn_forward.1} parent=1 // pred_region
      _
    $region21: #{decoder_rnn_forward.1} parent=1 // pred_fallthru
      _
    // Predicated region
    $region22: #{decoder_rnn_forward.1} parent=1 // pred_check
      _
    $region23: #{decoder_rnn_forward.1} parent=1 // pred_check_branch
      %45 = sbr.rel (0) target = $region25
    $region24: #{decoder_rnn_forward.1} parent=1 // pred_region
      _
    $region25: #{decoder_rnn_forward.1} parent=1 // pred_fallthru
      _
    // Predicated region
    $region26: #{decoder_rnn_forward.1} parent=1 // pred_check
      _
    $region27: #{decoder_rnn_forward.1} parent=1 // pred_check_branch
      %47 = sbr.rel (0) target = $region29
    $region28: #{decoder_rnn_forward.1} parent=1 // pred_region
      _
    $region29: #{decoder_rnn_forward.1} parent=1 // pred_fallthru
      _
    // Predicated region
    $region30: #{decoder_rnn_forward.1} parent=1 // pred_check
      _
    $region31: #{decoder_rnn_forward.1} parent=1 // pred_check_branch
      %49 = sbr.rel (0) target = $region33
    $region32: #{decoder_rnn_forward.1} parent=1 // pred_region
      _
    $region33: #{decoder_rnn_forward.1} parent=1 // pred_fallthru
      _
    // Predicated region
    $region34: #{decoder_rnn_forward.1} parent=1 // pred_check
      _
    $region35: #{decoder_rnn_forward.1} parent=1 // pred_check_branch
      %51 = sbr.rel (0) target = $region37
    $region36: #{decoder_rnn_forward.1} parent=1 // pred_region
      _
    $region37: #{decoder_rnn_forward.1} parent=1 // pred_fallthru
      _
    // Predicated region
    $region38: #{decoder_rnn_forward.1} parent=1 // pred_check
      _
    $region39: #{decoder_rnn_forward.1} parent=1 // pred_check_branch
      %53 = sbr.rel (0) target = $region41
    $region40: #{decoder_rnn_forward.1} parent=1 // pred_region
      _
    $region41: #{decoder_rnn_forward.1} parent=1 // pred_fallthru
      _
    // Predicated region
    $region42: #{decoder_rnn_forward.1} parent=1 // pred_check
      _
    $region43: #{decoder_rnn_forward.1} parent=1 // pred_check_branch
      %55 = sbr.rel (0) target = $region45
    $region44: #{decoder_rnn_forward.1} parent=1 // pred_region
      _
    $region45: #{decoder_rnn_forward.1} parent=1 // pred_fallthru
      _
    // Predicated region
    $region46: #{decoder_rnn_forward.1} parent=1 // pred_check
      _
    $region47: #{decoder_rnn_forward.1} parent=1 // pred_check_branch
      %57 = sbr.rel (0) target = $region49
    $region48: #{decoder_rnn_forward.1} parent=1 // pred_region
      %58 = dma.done [#allocation5], 16
    $region49: #{decoder_rnn_forward.1} parent=1 // pred_fallthru
      _
    // Predicated region
    $region50: #{decoder_rnn_forward.1} parent=1 // pred_check
      _
    $region51: #{decoder_rnn_forward.1} parent=1 // pred_check_branch
      %60 = sbr.rel (0) target = $region53
    $region52: #{decoder_rnn_forward.1} parent=1 // pred_region
      %61 = dma.done [#allocation4], 128
    $region53: #{decoder_rnn_forward.1} parent=1 // pred_fallthru
      _
    %62 = sfence
    %v64 = vld [vmem:[#allocation6] sm:$0xff]
    %v65 = vld [vmem:[%s9] sm:$0xf]
    %v66 = vld [vmem:[%s9 + $0x4] sm:$0xf]
    %v67 = vld [vmem:[%s9 + $0x8] sm:$0xf]
    %v68 = vld [vmem:[%s9 + $0xc] sm:$0xf]
    %v69 = vld [vmem:[%s10] sm:$0x1]
    %v71 = vlaneseq
    %v72 = vshrl.u32 %v71, 7
    %v73 = vsub.s32 0, %v72
    %v74 = vrot.slane %v69, %v73
    %v75 = vld [vmem:[%s3] sm:$0xff]
    %v76 = vld [vmem:[%s3 + $0x8] sm:$0xff]
    %v77 = vld [vmem:[%s3 + $0x10] sm:$0xff]
    %v78 = vld [vmem:[%s3 + $0x18] sm:$0xff]
    %vm79 = vcmask 130048
    %v81 = vsel %vm79, %v64, 0
    %83 = vmatprep.subr.mxu0 %v76
    %84 = vmatpush1.msra.mxu0 %v75
    %85 = vmatprep.subr.mxu0 %v78
    %86 = vmatpush1.msra.mxu0 %v77
    %87 = vmatprep.subr.mxu0 0.0
    %88 = vmatpush1.msra.mxu0 0.0
    %89 = vmatprep.subr.mxu0 0.0
    %90 = vmatpush1.msra.mxu0 0.0
    %91 = vmatprep.subr.mxu0 0.0
    %92 = vmatpush1.msra.mxu0 0.0
    %93 = vmatprep.subr.mxu0 0.0
    %94 = vmatpush1.msra.mxu0 0.0
    %95 = vmatprep.subr.mxu0 0.0
    %96 = vmatpush1.msra.mxu0 0.0
    %97 = vmatprep.subr.mxu0 0.0
    %98 = vmatpush1.msra.mxu0 0.0
    %99 = vmatprep.subr.mxu0 0.0
    %100 = vmatpush1.msra.mxu0 0.0
    %101 = vmatprep.subr.mxu0 0.0
    %102 = vmatpush1.msra.mxu0 0.0
    %103 = vmatprep.subr.mxu0 0.0
    %104 = vmatpush1.msra.mxu0 0.0
    %105 = vmatprep.subr.mxu0 0.0
    %106 = vmatpush1.msra.mxu0 0.0
    %107 = vmatprep.subr.mxu0 0.0
    %108 = vmatpush1.msra.mxu0 0.0
    %109 = vmatprep.subr.mxu0 0.0
    %110 = vmatpush1.msra.mxu0 0.0
    %111 = vmatprep.subr.mxu0 0.0
    %112 = vmatpush1.msra.mxu0 0.0
    %113 = vmatprep.subr.mxu0 0.0
    %114 = vmatpush1.msra.mxu0 0.0
    %115 = vmatprep.subr.mxu0 0.0
    %116 = vmatpush1.msra.mxu0 0.0
    %117 = vmatprep.subr.mxu0 0.0
    %118 = vmatpush1.msra.mxu0 0.0
    %119 = vmatprep.subr.mxu0 0.0
    %120 = vmatpush1.msra.mxu0 0.0
    %121 = vmatprep.subr.mxu0 0.0
    %122 = vmatpush1.msra.mxu0 0.0
    %123 = vmatprep.subr.mxu0 0.0
    %124 = vmatpush1.msra.mxu0 0.0
    %125 = vmatprep.subr.mxu0 0.0
    %126 = vmatpush1.msra.mxu0 0.0
    %127 = vmatprep.subr.mxu0 0.0
    %128 = vmatpush1.msra.mxu0 0.0
    %129 = vmatprep.subr.mxu0 0.0
    %130 = vmatpush1.msra.mxu0 0.0
    %131 = vmatprep.subr.mxu0 0.0
    %132 = vmatpush1.msra.mxu0 0.0
    %133 = vmatprep.subr.mxu0 0.0
    %134 = vmatpush1.msra.mxu0 0.0
    %135 = vmatprep.subr.mxu0 0.0
    %136 = vmatpush1.msra.mxu0 0.0
    %137 = vmatprep.subr.mxu0 0.0
    %138 = vmatpush1.msra.mxu0 0.0
    %139 = vmatprep.subr.mxu0 0.0
    %140 = vmatpush1.msra.mxu0 0.0
    %141 = vmatprep.subr.mxu0 0.0
    %142 = vmatpush1.msra.mxu0 0.0
    %143 = vmatprep.subr.mxu0 0.0
    %144 = vmatpush1.msra.mxu0 0.0
    %145 = vmatprep.subr.mxu0 0.0
    %146 = vmatpush1.msra.mxu0 0.0
    %147 = vmatprep.mubr.f32.mxu0 0.0
    %148 = vmatmul.mubr.f32.gmra.mrb[0].mxu0 %v81
    %v149 = vpop.f32.mrb[0].mxu0
    %v150 = vadd.f32 0.0, %v149
    %v151 = vpop.f32.mrb[0].mxu0
    %v152 = vadd.f32 0.0, %v151
    %153 = vdwg.mxu0
    %v154 = vld [vmem:[%s5] sm:$0x1]
    %v156 = vlaneseq
    %v157 = vshrl.u32 %v156, 7
    %v158 = vsub.s32 0, %v157
    %v159 = vrot.slane %v154, %v158
    %v161 = vadd.f32 %v150, %v159
    %v162 = vld [vmem:[%s6] sm:$0x1]
    %v164 = vlaneseq
    %v165 = vshrl.u32 %v164, 7
    %v166 = vsub.s32 0, %v165
    %v167 = vrot.slane %v162, %v166
    %168 = vrot.lane.b32.xlu0 %v167, 96
    %v169 = vpop.permute.xlu0 %168
    %v171 = vadd.f32 %v150, %v169
    %v172 = vld [vmem:[%s4] sm:$0x1]
    %v174 = vlaneseq
    %v175 = vshrl.u32 %v174, 7
    %v176 = vsub.s32 0, %v175
    %v177 = vrot.slane %v172, %v176
    %v179 = vadd.f32 %v152, %v177
    %v180 = vld [vmem:[%s1] sm:$0xf]
    %v181 = vld [vmem:[%s1 + $0x4] sm:$0xf]
    %v182 = vld [vmem:[%s1 + $0x8] sm:$0xf]
    %v183 = vld [vmem:[%s1 + $0xc] sm:$0xf]
    %v184 = vld [vmem:[%s1 + $0x10] sm:$0xf]
    %v185 = vld [vmem:[%s1 + $0x14] sm:$0xf]
    %v186 = vld [vmem:[%s1 + $0x18] sm:$0xf]
    %v187 = vld [vmem:[%s1 + $0x1c] sm:$0xf]
    %v188 = vld [vmem:[%s8] sm:$0xf]
    %v189 = vld [vmem:[%s8 + $0x4] sm:$0xf]
    %v190 = vld [vmem:[%s8 + $0x8] sm:$0xf]
    %v191 = vld [vmem:[%s8 + $0xc] sm:$0xf]
    %v200 = vunpack.c.l.b16 %v180
    %v201 = vunpack.c.l.b16 %v181
    %v202 = vunpack.c.l.b16 %v182
    %v203 = vunpack.c.l.b16 %v183
    %v204 = vunpack.c.l.b16 %v184
    %v205 = vunpack.c.l.b16 %v185
    %v206 = vunpack.c.l.b16 %v186
    %v207 = vunpack.c.l.b16 %v187
    %v208 = vpack.c.b16 %v201, %v200
    %v209 = vpack.c.b16 %v203, %v202
    %v210 = vpack.c.b16 %v205, %v204
    %v211 = vpack.c.b16 %v207, %v206
    %v216 = vunpack.c.l.b16 %v188
    %v217 = vunpack.c.l.b16 %v189
    %v218 = vunpack.c.l.b16 %v190
    %v219 = vunpack.c.l.b16 %v191
    %v220 = vpack.c.b16 %v217, %v216
    %v221 = vpack.c.b16 %v219, %v218
    %vm224 = vcmask 261120
    %v226 = vsel %vm224, %v208, 0
    %v229 = vsel %vm224, %v209, 0
    %v232 = vsel %vm224, %v210, 0
    %v235 = vsel %vm224, %v211, 0
    %237 = vmatprep.subr.bf16.mxu0 0
    %238 = vmatpush1.bf16.msra.mxu0 %v220
    %239 = vmatprep.subr.bf16.mxu0 0
    %240 = vmatpush1.bf16.msra.mxu0 %v221
    %241 = vmatprep.subr.bf16.mxu0 0
    %242 = vmatpush1.bf16.msra.mxu0 0
    %243 = vmatprep.subr.bf16.mxu0 0
    %244 = vmatpush1.bf16.msra.mxu0 0
    %245 = vmatprep.subr.bf16.mxu0 0
    %246 = vmatpush1.bf16.msra.mxu0 0
    %247 = vmatprep.subr.bf16.mxu0 0
    %248 = vmatpush1.bf16.msra.mxu0 0
    %249 = vmatprep.subr.bf16.mxu0 0
    %250 = vmatpush1.bf16.msra.mxu0 0
    %251 = vmatprep.subr.bf16.mxu0 0
    %252 = vmatpush1.bf16.msra.mxu0 0
    %253 = vmatprep.subr.bf16.mxu0 0
    %254 = vmatpush1.bf16.msra.mxu0 0
    %255 = vmatprep.subr.bf16.mxu0 0
    %256 = vmatpush1.bf16.msra.mxu0 0
    %257 = vmatprep.subr.bf16.mxu0 0
    %258 = vmatpush1.bf16.msra.mxu0 0
    %259 = vmatprep.subr.bf16.mxu0 0
    %260 = vmatpush1.bf16.msra.mxu0 0
    %261 = vmatprep.subr.bf16.mxu0 0
    %262 = vmatpush1.bf16.msra.mxu0 0
    %263 = vmatprep.subr.bf16.mxu0 0
    %264 = vmatpush1.bf16.msra.mxu0 0
    %265 = vmatprep.subr.bf16.mxu0 0
    %266 = vmatpush1.bf16.msra.mxu0 0
    %267 = vmatprep.subr.bf16.mxu0 0
    %268 = vmatpush1.bf16.msra.mxu0 0
    %269 = vmatprep.mubr.bf16.mxu0 0
    %270 = vmatmul.mubr.bf16.gmra.mrb[0].mxu0 %v226
    %v271 = vpop.f32.mrb[0].mxu0
    %v272 = vadd.f32 0.0, %v271
    %v273 = vpop.f32.mrb[0].mxu0
    %v274 = vpop.f32.mrb[0].mxu0
    %v275 = vadd.f32 0.0, %v274
    %v276 = vpop.f32.mrb[0].mxu0
    %277 = vmatprep.mubr.bf16.mxu0 0
    %278 = vmatmul.mubr.bf16.gmra.mrb[0].mxu0 %v229
    %v279 = vpop.f32.mrb[0].mxu0
    %v280 = vadd.f32 0.0, %v279
    %v281 = vpop.f32.mrb[0].mxu0
    %v282 = vpop.f32.mrb[0].mxu0
    %v283 = vadd.f32 0.0, %v282
    %v284 = vpop.f32.mrb[0].mxu0
    %285 = vmatprep.mubr.bf16.mxu0 0
    %286 = vmatmul.mubr.bf16.gmra.mrb[0].mxu0 %v232
    %v287 = vpop.f32.mrb[0].mxu0
    %v288 = vadd.f32 0.0, %v287
    %v289 = vpop.f32.mrb[0].mxu0
    %v290 = vpop.f32.mrb[0].mxu0
    %v291 = vadd.f32 0.0, %v290
    %v292 = vpop.f32.mrb[0].mxu0
    %293 = vmatprep.mubr.bf16.mxu0 0
    %294 = vmatmul.mubr.bf16.gmra.mrb[0].mxu0 %v235
    %v295 = vpop.f32.mrb[0].mxu0
    %v296 = vadd.f32 0.0, %v295
    %v297 = vpop.f32.mrb[0].mxu0
    %v298 = vpop.f32.mrb[0].mxu0
    %v299 = vadd.f32 0.0, %v298
    %v300 = vpop.f32.mrb[0].mxu0
    %301 = vdwg.mxu0
    %vm302 = vcmask 785408
    %303 = vst.msk [vmem:[#allocation2] sm:$0xff] %vm302, %v272
    %304 = vst.msk [vmem:[#allocation2 + $0x8] sm:$0xff] %vm302, %v275
    %305 = vst.msk [vmem:[#allocation2 + $0x10] sm:$0xff] %vm302, %v280
    %306 = vst.msk [vmem:[#allocation2 + $0x18] sm:$0xff] %vm302, %v283
    %307 = vst.msk [vmem:[#allocation2 + $0x20] sm:$0xff] %vm302, %v288
    %308 = vst.msk [vmem:[#allocation2 + $0x28] sm:$0xff] %vm302, %v291
    %309 = vst.msk [vmem:[#allocation2 + $0x30] sm:$0xff] %vm302, %v296
    %310 = vst.msk [vmem:[#allocation2 + $0x38] sm:$0xff] %vm302, %v299
    %v311 = vpack.c.bf16 %v179, %v179
    %v316 = vunpack.c.l.b16 %v65
    %v317 = vunpack.c.l.b16 %v66
    %v318 = vunpack.c.l.b16 %v67
    %v319 = vunpack.c.l.b16 %v68
    %v320 = vpack.c.b16 %v317, %v316
    %v321 = vpack.c.b16 %v319, %v318
    %v325 = vsel %vm224, %v311, 0
    %327 = vmatprep.subr.bf16.mxu0 0
    %328 = vmatpush1.bf16.msra.mxu0 %v320
    %329 = vmatprep.subr.bf16.mxu0 0
    %330 = vmatpush1.bf16.msra.mxu0 %v321
    %331 = vmatprep.subr.bf16.mxu0 0
    %332 = vmatpush1.bf16.msra.mxu0 0
    %333 = vmatprep.subr.bf16.mxu0 0
    %334 = vmatpush1.bf16.msra.mxu0 0
    %335 = vmatprep.subr.bf16.mxu0 0
    %336 = vmatpush1.bf16.msra.mxu0 0
    %337 = vmatprep.subr.bf16.mxu0 0
    %338 = vmatpush1.bf16.msra.mxu0 0
    %339 = vmatprep.subr.bf16.mxu0 0
    %340 = vmatpush1.bf16.msra.mxu0 0
    %341 = vmatprep.subr.bf16.mxu0 0
    %342 = vmatpush1.bf16.msra.mxu0 0
    %343 = vmatprep.subr.bf16.mxu0 0
    %344 = vmatpush1.bf16.msra.mxu0 0
    %345 = vmatprep.subr.bf16.mxu0 0
    %346 = vmatpush1.bf16.msra.mxu0 0
    %347 = vmatprep.subr.bf16.mxu0 0
    %348 = vmatpush1.bf16.msra.mxu0 0
    %349 = vmatprep.subr.bf16.mxu0 0
    %350 = vmatpush1.bf16.msra.mxu0 0
    %351 = vmatprep.subr.bf16.mxu0 0
    %352 = vmatpush1.bf16.msra.mxu0 0
    %353 = vmatprep.subr.bf16.mxu0 0
    %354 = vmatpush1.bf16.msra.mxu0 0
    %355 = vmatprep.subr.bf16.mxu0 0
    %356 = vmatpush1.bf16.msra.mxu0 0
    %357 = vmatprep.subr.bf16.mxu0 0
    %358 = vmatpush1.bf16.msra.mxu0 0
    %359 = vmatprep.mubr.bf16.mxu0 0
    %360 = vmatmul.mubr.bf16.gmra.mrb[0].mxu0 %v325
    %v361 = vpop.f32.mrb[0].mxu0
    %v362 = vadd.f32 0.0, %v361
    %v363 = vpop.f32.mrb[0].mxu0
    %v364 = vpop.f32.mrb[0].mxu0
    %v365 = vpop.f32.mrb[0].mxu0
    %366 = vdwg.mxu0
    %v367 = vlaneseq
    %v368 = vand.u32 %v367, 127
    %v369 = vld [vmem:[%s7] sm:$0x1]
    %v371 = vlaneseq
    %v372 = vshrl.u32 %v371, 7
    %v373 = vsub.s32 0, %v372
    %v374 = vrot.slane %v369, %v373
    %v376 = vadd.f32 %v161, %v374
    %378 = vrot.lane.b32.xlu0 %v362, 96
    %v379 = vpop.permute.xlu0 %378
    %v381 = vadd.f32 %v376, %v379
    %v382 = vxor.u32 %v381, 2147483648
    %v383 = vmul.f32 %v382, 1.442695
    %v384 = vpow.pop %v383
    %v385 = vadd.f32 %v384, 1.0
    %v386 = vrcp.pop %v385
    %v387 = vmul.f32 1.0, %v386
    %388 = vrot.lane.b32.xlu0 %v74, 96
    %v389 = vpop.permute.xlu0 %388
    %v391 = vadd.f32 %v362, %v389
    %393 = vrot.lane.b32.xlu0 %v391, 32
    %v394 = vpop.permute.xlu0 %393
    %v396 = vmul.f32 %v387, %v394
    %398 = vrot.lane.b32.xlu0 %v396, 64
    %v399 = vpop.permute.xlu0 %398
    %v401 = vadd.f32 %v376, %v399
    %v402 = vtanh.pop %v401
    %v403 = vsub.f32 1.0, %v387
    %405 = vrot.lane.b32.xlu0 %v402, 96
    %v406 = vpop.permute.xlu0 %405
    %v408 = vmul.f32 %v403, %v406
    %410 = vrot.lane.b32.xlu0 %v179, 32
    %v411 = vpop.permute.xlu0 %410
    %v413 = vmul.f32 %v387, %v411
    %v414 = vadd.f32 %v408, %v413
    %v415 = vpack.c.bf16 %v414, %v414
    %417 = vrot.lane.b32.xlu0 %v415, 96
    %v418 = vpop.permute.xlu0 %417
    %v420 = vsel %vm224, %v418, 0
    %422 = vmatprep.subr.bf16.mxu0 0
    %423 = vmatpush1.bf16.msra.mxu0 %v320
    %424 = vmatprep.subr.bf16.mxu0 0
    %425 = vmatpush1.bf16.msra.mxu0 %v321
    %426 = vmatprep.subr.bf16.mxu0 0
    %427 = vmatpush1.bf16.msra.mxu0 0
    %428 = vmatprep.subr.bf16.mxu0 0
    %429 = vmatpush1.bf16.msra.mxu0 0
    %430 = vmatprep.subr.bf16.mxu0 0
    %431 = vmatpush1.bf16.msra.mxu0 0
    %432 = vmatprep.subr.bf16.mxu0 0
    %433 = vmatpush1.bf16.msra.mxu0 0
    %434 = vmatprep.subr.bf16.mxu0 0
    %435 = vmatpush1.bf16.msra.mxu0 0
    %436 = vmatprep.subr.bf16.mxu0 0
    %437 = vmatpush1.bf16.msra.mxu0 0
    %438 = vmatprep.subr.bf16.mxu0 0
    %439 = vmatpush1.bf16.msra.mxu0 0
    %440 = vmatprep.subr.bf16.mxu0 0
    %441 = vmatpush1.bf16.msra.mxu0 0
    %442 = vmatprep.subr.bf16.mxu0 0
    %443 = vmatpush1.bf16.msra.mxu0 0
    %444 = vmatprep.subr.bf16.mxu0 0
    %445 = vmatpush1.bf16.msra.mxu0 0
    %446 = vmatprep.subr.bf16.mxu0 0
    %447 = vmatpush1.bf16.msra.mxu0 0
    %448 = vmatprep.subr.bf16.mxu0 0
    %449 = vmatpush1.bf16.msra.mxu0 0
    %450 = vmatprep.subr.bf16.mxu0 0
    %451 = vmatpush1.bf16.msra.mxu0 0
    %452 = vmatprep.subr.bf16.mxu0 0
    %453 = vmatpush1.bf16.msra.mxu0 0
    %454 = vmatprep.mubr.bf16.mxu0 0
    %455 = vmatmul.mubr.bf16.gmra.mrb[0].mxu0 %v420
    %v456 = vpop.f32.mrb[0].mxu0
    %v457 = vadd.f32 0.0, %v456
    %v458 = vpop.f32.mrb[0].mxu0
    %v459 = vpop.f32.mrb[0].mxu0
    %v460 = vpop.f32.mrb[0].mxu0
    %461 = vdwg.mxu0
    %463 = vrot.lane.b32.xlu0 %v171, 32
    %v464 = vpop.permute.xlu0 %463
    %v466 = vadd.f32 %v457, %v464
    %467 = vst.msk [vmem:[%s11] sm:$0xff] %vm224, %v466
    %s468 = sld [smem:[#allocation3]]
    %p469 = scmp.ne.s32.totalorder %s468, 0
    // Predicated region
    $region54: #{decoder_rnn_forward.1} parent=1 // pred_check
      %p470 = pneg %p469
    $region55: #{decoder_rnn_forward.1} parent=1 // pred_check_branch
      %472 = sbr.rel (%p470) target = $region57
    $region56: #{decoder_rnn_forward.1} parent=1 // pred_region
      %v473 = vld [vmem:[#allocation2] sm:$0xff]
    $region57: #{decoder_rnn_forward.1} parent=1 // pred_fallthru
      %v474 = vphi 0, %v473
    %p475 = pneg %p469
    // Predicated region
    $region58: #{decoder_rnn_forward.1} parent=1 // pred_check
      _
    $region59: #{decoder_rnn_forward.1} parent=1 // pred_check_branch
      %477 = sbr.rel (%p469) target = $region61
    $region60: #{decoder_rnn_forward.1} parent=1 // pred_region
      %v478 = vsel %vm224, %v466, -inf
      %479 = vmax.xlane.f32.xlu0 %v478
      %v480 = vpop.xlane.xlu0 %479
      %vm481 = vcmp.ge.f32.partialorder %v466, %v480
      %v482 = vsel %vm481, %v368, 32
      %v483 = vsel %vm224, %v482, 2147483647
      %v484 = vand.u32 %v483, 65535
      %v485 = vshra.s32 %v483, 16
      %v486 = vcvt.s32.f32 %v484
      %v487 = vcvt.s32.f32 %v485
      %488 = vmin.xlane.f32.xlu0 %v487
      %v489 = vpop.xlane.xlu0 %488
      %vm490 = vcmp.eq.f32.partialorder %v487, %v489
      %v491 = vsel %vm490, %v486, inf
      %492 = vmin.xlane.f32.xlu0 %v491
      %v493 = vpop.xlane.xlu0 %492
      %v494 = vcvt.f32.s32 %v493
      %v495 = vcvt.f32.s32 %v489
      %v496 = vshll.u32 %v495, 16
      %v497 = vadd.s32 %v496, %v494
      %vm498 = vcmp.eq.s32.totalorder %v368, %v497
      %v499 = vsel %vm498, 1, 0
      %v500 = vcvt.s32.f32 %v499
      %v501 = vpack.c.bf16 %v500, %v500
      %v502 = vld [vmem:[%s8] sm:$0xf]
      %v503 = vld [vmem:[%s8 + $0x4] sm:$0xf]
      %v504 = vld [vmem:[%s8 + $0x8] sm:$0xf]
      %v505 = vld [vmem:[%s8 + $0xc] sm:$0xf]
      %v510 = vunpack.c.l.b16 %v502
      %v511 = vunpack.c.l.b16 %v503
      %v512 = vunpack.c.l.b16 %v504
      %v513 = vunpack.c.l.b16 %v505
      %v514 = vpack.c.b16 %v511, %v510
      %v515 = vpack.c.b16 %v513, %v512
      %v519 = vsel %vm224, %v501, 0
      %521 = vmatprep.subr.bf16.mxu0 0
      %522 = vmatpush1.bf16.msra.mxu0 %v514
      %523 = vmatprep.subr.bf16.mxu0 0
      %524 = vmatpush1.bf16.msra.mxu0 %v515
      %525 = vmatprep.subr.bf16.mxu0 0
      %526 = vmatpush1.bf16.msra.mxu0 0
      %527 = vmatprep.subr.bf16.mxu0 0
      %528 = vmatpush1.bf16.msra.mxu0 0
      %529 = vmatprep.subr.bf16.mxu0 0
      %530 = vmatpush1.bf16.msra.mxu0 0
      %531 = vmatprep.subr.bf16.mxu0 0
      %532 = vmatpush1.bf16.msra.mxu0 0
      %533 = vmatprep.subr.bf16.mxu0 0
      %534 = vmatpush1.bf16.msra.mxu0 0
      %535 = vmatprep.subr.bf16.mxu0 0
      %536 = vmatpush1.bf16.msra.mxu0 0
      %537 = vmatprep.subr.bf16.mxu0 0
      %538 = vmatpush1.bf16.msra.mxu0 0
      %539 = vmatprep.subr.bf16.mxu0 0
      %540 = vmatpush1.bf16.msra.mxu0 0
      %541 = vmatprep.subr.bf16.mxu0 0
      %542 = vmatpush1.bf16.msra.mxu0 0
      %543 = vmatprep.subr.bf16.mxu0 0
      %544 = vmatpush1.bf16.msra.mxu0 0
      %545 = vmatprep.subr.bf16.mxu0 0
      %546 = vmatpush1.bf16.msra.mxu0 0
      %547 = vmatprep.subr.bf16.mxu0 0
      %548 = vmatpush1.bf16.msra.mxu0 0
      %549 = vmatprep.subr.bf16.mxu0 0
      %550 = vmatpush1.bf16.msra.mxu0 0
      %551 = vmatprep.subr.bf16.mxu0 0
      %552 = vmatpush1.bf16.msra.mxu0 0
      %553 = vmatprep.mubr.bf16.mxu0 0
      %554 = vmatmul.mubr.bf16.gmra.mrb[0].mxu0 %v519
      %v555 = vpop.f32.mrb[0].mxu0
      %v556 = vadd.f32 0.0, %v555
      %v557 = vpop.f32.mrb[0].mxu0
      %v558 = vpop.f32.mrb[0].mxu0
      %v559 = vpop.f32.mrb[0].mxu0
      %560 = vdwg.mxu0
    $region61: #{decoder_rnn_forward.1} parent=1 // pred_fallthru
      %v561 = vphi %v474, %v556
    %v562 = vadd.f32 %v161, %v561
    %564 = vrot.lane.b32.xlu0 %v457, 96
    %v565 = vpop.permute.xlu0 %564
    %v567 = vadd.f32 %v562, %v565
    %v568 = vxor.u32 %v567, 2147483648
    %v569 = vmul.f32 %v568, 1.442695
    %v570 = vpow.pop %v569
    %v571 = vadd.f32 %v570, 1.0
    %v572 = vrcp.pop %v571
    %v573 = vmul.f32 1.0, %v572
    %v574 = vadd.f32 %v457, %v389
    %576 = vrot.lane.b32.xlu0 %v574, 32
    %v577 = vpop.permute.xlu0 %576
    %v579 = vmul.f32 %v573, %v577
    %581 = vrot.lane.b32.xlu0 %v579, 64
    %v582 = vpop.permute.xlu0 %581
    %v584 = vadd.f32 %v562, %v582
    %v585 = vtanh.pop %v584
    %v586 = vsub.f32 1.0, %v573
    %588 = vrot.lane.b32.xlu0 %v585, 96
    %v589 = vpop.permute.xlu0 %588
    %v591 = vmul.f32 %v586, %v589
    %v592 = vmul.f32 %v573, %v414
    %v593 = vadd.f32 %v591, %v592
    %v594 = vpack.c.bf16 %v593, %v593
    %596 = vrot.lane.b32.xlu0 %v594, 96
    %v597 = vpop.permute.xlu0 %596
    %v599 = vsel %vm224, %v597, 0
    %601 = vmatprep.subr.bf16.mxu0 0
    %602 = vmatpush1.bf16.msra.mxu0 %v320
    %603 = vmatprep.subr.bf16.mxu0 0
    %604 = vmatpush1.bf16.msra.mxu0 %v321
    %605 = vmatprep.subr.bf16.mxu0 0
    %606 = vmatpush1.bf16.msra.mxu0 0
    %607 = vmatprep.subr.bf16.mxu0 0
    %608 = vmatpush1.bf16.msra.mxu0 0
    %609 = vmatprep.subr.bf16.mxu0 0
    %610 = vmatpush1.bf16.msra.mxu0 0
    %611 = vmatprep.subr.bf16.mxu0 0
    %612 = vmatpush1.bf16.msra.mxu0 0
    %613 = vmatprep.subr.bf16.mxu0 0
    %614 = vmatpush1.bf16.msra.mxu0 0
    %615 = vmatprep.subr.bf16.mxu0 0
    %616 = vmatpush1.bf16.msra.mxu0 0
    %617 = vmatprep.subr.bf16.mxu0 0
    %618 = vmatpush1.bf16.msra.mxu0 0
    %619 = vmatprep.subr.bf16.mxu0 0
    %620 = vmatpush1.bf16.msra.mxu0 0
    %621 = vmatprep.subr.bf16.mxu0 0
    %622 = vmatpush1.bf16.msra.mxu0 0
    %623 = vmatprep.subr.bf16.mxu0 0
    %624 = vmatpush1.bf16.msra.mxu0 0
    %625 = vmatprep.subr.bf16.mxu0 0
    %626 = vmatpush1.bf16.msra.mxu0 0
    %627 = vmatprep.subr.bf16.mxu0 0
    %628 = vmatpush1.bf16.msra.mxu0 0
    %629 = vmatprep.subr.bf16.mxu0 0
    %630 = vmatpush1.bf16.msra.mxu0 0
    %631 = vmatprep.subr.bf16.mxu0 0
    %632 = vmatpush1.bf16.msra.mxu0 0
    %633 = vmatprep.mubr.bf16.mxu0 0
    %634 = vmatmul.mubr.bf16.gmra.mrb[0].mxu0 %v599
    %v635 = vpop.f32.mrb[0].mxu0
    %v636 = vadd.f32 0.0, %v635
    %v637 = vpop.f32.mrb[0].mxu0
    %v638 = vpop.f32.mrb[0].mxu0
    %v639 = vpop.f32.mrb[0].mxu0
    %640 = vdwg.mxu0
    %v641 = vadd.f32 %v636, %v464
    %643 = vrot.lane.b32.xlu0 %v641, 32
    %v644 = vpop.permute.xlu0 %643
    %vm646 = vcmask 523520
    %647 = vst.msk [vmem:[%s11] sm:$0xff] %vm646, %v644
    %s648 = sld [smem:[#allocation3 + $0x1]]
    %p649 = scmp.ne.s32.totalorder %s648, 0
    // Predicated region
    $region62: #{decoder_rnn_forward.1} parent=1 // pred_check
      %p650 = pneg %p649
    $region63: #{decoder_rnn_forward.1} parent=1 // pred_check_branch
      %652 = sbr.rel (%p650) target = $region65
    $region64: #{decoder_rnn_forward.1} parent=1 // pred_region
      %v653 = vld [vmem:[#allocation2 + $0x8] sm:$0xff]
    $region65: #{decoder_rnn_forward.1} parent=1 // pred_fallthru
      %v654 = vphi 0, %v653
    %p655 = pneg %p649
    // Predicated region
    $region66: #{decoder_rnn_forward.1} parent=1 // pred_check
      _
    $region67: #{decoder_rnn_forward.1} parent=1 // pred_check_branch
      %657 = sbr.rel (%p649) target = $region69
    $region68: #{decoder_rnn_forward.1} parent=1 // pred_region
      %v658 = vsel %vm224, %v641, -inf
      %659 = vmax.xlane.f32.xlu0 %v658
      %v660 = vpop.xlane.xlu0 %659
      %vm661 = vcmp.ge.f32.partialorder %v641, %v660
      %v662 = vsel %vm661, %v368, 32
      %v663 = vsel %vm224, %v662, 2147483647
      %v664 = vand.u32 %v663, 65535
      %v665 = vshra.s32 %v663, 16
      %v666 = vcvt.s32.f32 %v664
      %v667 = vcvt.s32.f32 %v665
      %668 = vmin.xlane.f32.xlu0 %v667
      %v669 = vpop.xlane.xlu0 %668
      %vm670 = vcmp.eq.f32.partialorder %v667, %v669
      %v671 = vsel %vm670, %v666, inf
      %672 = vmin.xlane.f32.xlu0 %v671
      %v673 = vpop.xlane.xlu0 %672
      %v674 = vcvt.f32.s32 %v673
      %v675 = vcvt.f32.s32 %v669
      %v676 = vshll.u32 %v675, 16
      %v677 = vadd.s32 %v676, %v674
      %vm678 = vcmp.eq.s32.totalorder %v368, %v677
      %v679 = vsel %vm678, 1, 0
      %v680 = vcvt.s32.f32 %v679
      %v681 = vpack.c.bf16 %v680, %v680
      %v682 = vld [vmem:[%s8] sm:$0xf]
      %v683 = vld [vmem:[%s8 + $0x4] sm:$0xf]
      %v684 = vld [vmem:[%s8 + $0x8] sm:$0xf]
      %v685 = vld [vmem:[%s8 + $0xc] sm:$0xf]
      %v690 = vunpack.c.l.b16 %v682
      %v691 = vunpack.c.l.b16 %v683
      %v692 = vunpack.c.l.b16 %v684
      %v693 = vunpack.c.l.b16 %v685
      %v694 = vpack.c.b16 %v691, %v690
      %v695 = vpack.c.b16 %v693, %v692
      %v699 = vsel %vm224, %v681, 0
      %701 = vmatprep.subr.bf16.mxu0 0
      %702 = vmatpush1.bf16.msra.mxu0 %v694
      %703 = vmatprep.subr.bf16.mxu0 0
      %704 = vmatpush1.bf16.msra.mxu0 %v695
      %705 = vmatprep.subr.bf16.mxu0 0
      %706 = vmatpush1.bf16.msra.mxu0 0
      %707 = vmatprep.subr.bf16.mxu0 0
      %708 = vmatpush1.bf16.msra.mxu0 0
      %709 = vmatprep.subr.bf16.mxu0 0
      %710 = vmatpush1.bf16.msra.mxu0 0
      %711 = vmatprep.subr.bf16.mxu0 0
      %712 = vmatpush1.bf16.msra.mxu0 0
      %713 = vmatprep.subr.bf16.mxu0 0
      %714 = vmatpush1.bf16.msra.mxu0 0
      %715 = vmatprep.subr.bf16.mxu0 0
      %716 = vmatpush1.bf16.msra.mxu0 0
      %717 = vmatprep.subr.bf16.mxu0 0
      %718 = vmatpush1.bf16.msra.mxu0 0
      %719 = vmatprep.subr.bf16.mxu0 0
      %720 = vmatpush1.bf16.msra.mxu0 0
      %721 = vmatprep.subr.bf16.mxu0 0
      %722 = vmatpush1.bf16.msra.mxu0 0
      %723 = vmatprep.subr.bf16.mxu0 0
      %724 = vmatpush1.bf16.msra.mxu0 0
      %725 = vmatprep.subr.bf16.mxu0 0
      %726 = vmatpush1.bf16.msra.mxu0 0
      %727 = vmatprep.subr.bf16.mxu0 0
      %728 = vmatpush1.bf16.msra.mxu0 0
      %729 = vmatprep.subr.bf16.mxu0 0
      %730 = vmatpush1.bf16.msra.mxu0 0
      %731 = vmatprep.subr.bf16.mxu0 0
      %732 = vmatpush1.bf16.msra.mxu0 0
      %733 = vmatprep.mubr.bf16.mxu0 0
      %734 = vmatmul.mubr.bf16.gmra.mrb[0].mxu0 %v699
      %v735 = vpop.f32.mrb[0].mxu0
      %v736 = vadd.f32 0.0, %v735
      %v737 = vpop.f32.mrb[0].mxu0
      %v738 = vpop.f32.mrb[0].mxu0
      %v739 = vpop.f32.mrb[0].mxu0
      %740 = vdwg.mxu0
    $region69: #{decoder_rnn_forward.1} parent=1 // pred_fallthru
      %v741 = vphi %v654, %v736
    %v742 = vadd.f32 %v161, %v741
    %744 = vrot.lane.b32.xlu0 %v636, 96
    %v745 = vpop.permute.xlu0 %744
    %v747 = vadd.f32 %v742, %v745
    %v748 = vxor.u32 %v747, 2147483648
    %v749 = vmul.f32 %v748, 1.442695
    %v750 = vpow.pop %v749
    %v751 = vadd.f32 %v750, 1.0
    %v752 = vrcp.pop %v751
    %v753 = vmul.f32 1.0, %v752
    %v754 = vadd.f32 %v636, %v389
    %756 = vrot.lane.b32.xlu0 %v754, 32
    %v757 = vpop.permute.xlu0 %756
    %v759 = vmul.f32 %v753, %v757
    %761 = vrot.lane.b32.xlu0 %v759, 64
    %v762 = vpop.permute.xlu0 %761
    %v764 = vadd.f32 %v742, %v762
    %v765 = vtanh.pop %v764
    %v766 = vsub.f32 1.0, %v753
    %768 = vrot.lane.b32.xlu0 %v765, 96
    %v769 = vpop.permute.xlu0 %768
    %v771 = vmul.f32 %v766, %v769
    %v772 = vmul.f32 %v753, %v593
    %v773 = vadd.f32 %v771, %v772
    %v774 = vpack.c.bf16 %v773, %v773
    %776 = vrot.lane.b32.xlu0 %v774, 96
    %v777 = vpop.permute.xlu0 %776
    %v779 = vsel %vm224, %v777, 0
    %781 = vmatprep.subr.bf16.mxu0 0
    %782 = vmatpush1.bf16.msra.mxu0 %v320
    %783 = vmatprep.subr.bf16.mxu0 0
    %784 = vmatpush1.bf16.msra.mxu0 %v321
    %785 = vmatprep.subr.bf16.mxu0 0
    %786 = vmatpush1.bf16.msra.mxu0 0
    %787 = vmatprep.subr.bf16.mxu0 0
    %788 = vmatpush1.bf16.msra.mxu0 0
    %789 = vmatprep.subr.bf16.mxu0 0
    %790 = vmatpush1.bf16.msra.mxu0 0
    %791 = vmatprep.subr.bf16.mxu0 0
    %792 = vmatpush1.bf16.msra.mxu0 0
    %793 = vmatprep.subr.bf16.mxu0 0
    %794 = vmatpush1.bf16.msra.mxu0 0
    %795 = vmatprep.subr.bf16.mxu0 0
    %796 = vmatpush1.bf16.msra.mxu0 0
    %797 = vmatprep.subr.bf16.mxu0 0
    %798 = vmatpush1.bf16.msra.mxu0 0
    %799 = vmatprep.subr.bf16.mxu0 0
    %800 = vmatpush1.bf16.msra.mxu0 0
    %801 = vmatprep.subr.bf16.mxu0 0
    %802 = vmatpush1.bf16.msra.mxu0 0
    %803 = vmatprep.subr.bf16.mxu0 0
    %804 = vmatpush1.bf16.msra.mxu0 0
    %805 = vmatprep.subr.bf16.mxu0 0
    %806 = vmatpush1.bf16.msra.mxu0 0
    %807 = vmatprep.subr.bf16.mxu0 0
    %808 = vmatpush1.bf16.msra.mxu0 0
    %809 = vmatprep.subr.bf16.mxu0 0
    %810 = vmatpush1.bf16.msra.mxu0 0
    %811 = vmatprep.subr.bf16.mxu0 0
    %812 = vmatpush1.bf16.msra.mxu0 0
    %813 = vmatprep.mubr.bf16.mxu0 0
    %814 = vmatmul.mubr.bf16.gmra.mrb[0].mxu0 %v779
    %v815 = vpop.f32.mrb[0].mxu0
    %v816 = vadd.f32 0.0, %v815
    %v817 = vpop.f32.mrb[0].mxu0
    %v818 = vpop.f32.mrb[0].mxu0
    %v819 = vpop.f32.mrb[0].mxu0
    %820 = vdwg.mxu0
    %v821 = vadd.f32 %v816, %v464
    %823 = vrot.lane.b32.xlu0 %v821, 64
    %v824 = vpop.permute.xlu0 %823
    %vm826 = vcmask 785920
    %827 = vst.msk [vmem:[%s11] sm:$0xff] %vm826, %v824
    %s828 = sld [smem:[#allocation3 + $0x2]]
    %p829 = scmp.ne.s32.totalorder %s828, 0
    // Predicated region
    $region70: #{decoder_rnn_forward.1} parent=1 // pred_check
      %p830 = pneg %p829
    $region71: #{decoder_rnn_forward.1} parent=1 // pred_check_branch
      %832 = sbr.rel (%p830) target = $region73
    $region72: #{decoder_rnn_forward.1} parent=1 // pred_region
      %v833 = vld [vmem:[#allocation2 + $0x10] sm:$0xff]
    $region73: #{decoder_rnn_forward.1} parent=1 // pred_fallthru
      %v834 = vphi 0, %v833
    %p835 = pneg %p829
    // Predicated region
    $region74: #{decoder_rnn_forward.1} parent=1 // pred_check
      _
    $region75: #{decoder_rnn_forward.1} parent=1 // pred_check_branch
      %837 = sbr.rel (%p829) target = $region77
    $region76: #{decoder_rnn_forward.1} parent=1 // pred_region
      %v838 = vsel %vm224, %v821, -inf
      %839 = vmax.xlane.f32.xlu0 %v838
      %v840 = vpop.xlane.xlu0 %839
      %vm841 = vcmp.ge.f32.partialorder %v821, %v840
      %v842 = vsel %vm841, %v368, 32
      %v843 = vsel %vm224, %v842, 2147483647
      %v844 = vand.u32 %v843, 65535
      %v845 = vshra.s32 %v843, 16
      %v846 = vcvt.s32.f32 %v844
      %v847 = vcvt.s32.f32 %v845
      %848 = vmin.xlane.f32.xlu0 %v847
      %v849 = vpop.xlane.xlu0 %848
      %vm850 = vcmp.eq.f32.partialorder %v847, %v849
      %v851 = vsel %vm850, %v846, inf
      %852 = vmin.xlane.f32.xlu0 %v851
      %v853 = vpop.xlane.xlu0 %852
      %v854 = vcvt.f32.s32 %v853
      %v855 = vcvt.f32.s32 %v849
      %v856 = vshll.u32 %v855, 16
      %v857 = vadd.s32 %v856, %v854
      %vm858 = vcmp.eq.s32.totalorder %v368, %v857
      %v859 = vsel %vm858, 1, 0
      %v860 = vcvt.s32.f32 %v859
      %v861 = vpack.c.bf16 %v860, %v860
      %v862 = vld [vmem:[%s8] sm:$0xf]
      %v863 = vld [vmem:[%s8 + $0x4] sm:$0xf]
      %v864 = vld [vmem:[%s8 + $0x8] sm:$0xf]
      %v865 = vld [vmem:[%s8 + $0xc] sm:$0xf]
      %v870 = vunpack.c.l.b16 %v862
      %v871 = vunpack.c.l.b16 %v863
      %v872 = vunpack.c.l.b16 %v864
      %v873 = vunpack.c.l.b16 %v865
      %v874 = vpack.c.b16 %v871, %v870
      %v875 = vpack.c.b16 %v873, %v872
      %v879 = vsel %vm224, %v861, 0
      %881 = vmatprep.subr.bf16.mxu0 0
      %882 = vmatpush1.bf16.msra.mxu0 %v874
      %883 = vmatprep.subr.bf16.mxu0 0
      %884 = vmatpush1.bf16.msra.mxu0 %v875
      %885 = vmatprep.subr.bf16.mxu0 0
      %886 = vmatpush1.bf16.msra.mxu0 0
      %887 = vmatprep.subr.bf16.mxu0 0
      %888 = vmatpush1.bf16.msra.mxu0 0
      %889 = vmatprep.subr.bf16.mxu0 0
      %890 = vmatpush1.bf16.msra.mxu0 0
      %891 = vmatprep.subr.bf16.mxu0 0
      %892 = vmatpush1.bf16.msra.mxu0 0
      %893 = vmatprep.subr.bf16.mxu0 0
      %894 = vmatpush1.bf16.msra.mxu0 0
      %895 = vmatprep.subr.bf16.mxu0 0
      %896 = vmatpush1.bf16.msra.mxu0 0
      %897 = vmatprep.subr.bf16.mxu0 0
      %898 = vmatpush1.bf16.msra.mxu0 0
      %899 = vmatprep.subr.bf16.mxu0 0
      %900 = vmatpush1.bf16.msra.mxu0 0
      %901 = vmatprep.subr.bf16.mxu0 0
      %902 = vmatpush1.bf16.msra.mxu0 0
      %903 = vmatprep.subr.bf16.mxu0 0
      %904 = vmatpush1.bf16.msra.mxu0 0
      %905 = vmatprep.subr.bf16.mxu0 0
      %906 = vmatpush1.bf16.msra.mxu0 0
      %907 = vmatprep.subr.bf16.mxu0 0
      %908 = vmatpush1.bf16.msra.mxu0 0
      %909 = vmatprep.subr.bf16.mxu0 0
      %910 = vmatpush1.bf16.msra.mxu0 0
      %911 = vmatprep.subr.bf16.mxu0 0
      %912 = vmatpush1.bf16.msra.mxu0 0
      %913 = vmatprep.mubr.bf16.mxu0 0
      %914 = vmatmul.mubr.bf16.gmra.mrb[0].mxu0 %v879
      %v915 = vpop.f32.mrb[0].mxu0
      %v916 = vadd.f32 0.0, %v915
      %v917 = vpop.f32.mrb[0].mxu0
      %v918 = vpop.f32.mrb[0].mxu0
      %v919 = vpop.f32.mrb[0].mxu0
      %920 = vdwg.mxu0
    $region77: #{decoder_rnn_forward.1} parent=1 // pred_fallthru
      %v921 = vphi %v834, %v916
    %v922 = vadd.f32 %v161, %v921
    %924 = vrot.lane.b32.xlu0 %v816, 96
    %v925 = vpop.permute.xlu0 %924
    %v927 = vadd.f32 %v922, %v925
    %v928 = vxor.u32 %v927, 2147483648
    %v929 = vmul.f32 %v928, 1.442695
    %v930 = vpow.pop %v929
    %v931 = vadd.f32 %v930, 1.0
    %v932 = vrcp.pop %v931
    %v933 = vmul.f32 1.0, %v932
    %v934 = vadd.f32 %v816, %v389
    %936 = vrot.lane.b32.xlu0 %v934, 32
    %v937 = vpop.permute.xlu0 %936
    %v939 = vmul.f32 %v933, %v937
    %941 = vrot.lane.b32.xlu0 %v939, 64
    %v942 = vpop.permute.xlu0 %941
    %v944 = vadd.f32 %v922, %v942
    %v945 = vtanh.pop %v944
    %v946 = vsub.f32 1.0, %v933
    %948 = vrot.lane.b32.xlu0 %v945, 96
    %v949 = vpop.permute.xlu0 %948
    %v951 = vmul.f32 %v946, %v949
    %v952 = vmul.f32 %v933, %v773
    %v953 = vadd.f32 %v951, %v952
    %v954 = vpack.c.bf16 %v953, %v953
    %956 = vrot.lane.b32.xlu0 %v954, 96
    %v957 = vpop.permute.xlu0 %956
    %v959 = vsel %vm224, %v957, 0
    %961 = vmatprep.subr.bf16.mxu0 0
    %962 = vmatpush1.bf16.msra.mxu0 %v320
    %963 = vmatprep.subr.bf16.mxu0 0
    %964 = vmatpush1.bf16.msra.mxu0 %v321
    %965 = vmatprep.subr.bf16.mxu0 0
    %966 = vmatpush1.bf16.msra.mxu0 0
    %967 = vmatprep.subr.bf16.mxu0 0
    %968 = vmatpush1.bf16.msra.mxu0 0
    %969 = vmatprep.subr.bf16.mxu0 0
    %970 = vmatpush1.bf16.msra.mxu0 0
    %971 = vmatprep.subr.bf16.mxu0 0
    %972 = vmatpush1.bf16.msra.mxu0 0
    %973 = vmatprep.subr.bf16.mxu0 0
    %974 = vmatpush1.bf16.msra.mxu0 0
    %975 = vmatprep.subr.bf16.mxu0 0
    %976 = vmatpush1.bf16.msra.mxu0 0
    %977 = vmatprep.subr.bf16.mxu0 0
    %978 = vmatpush1.bf16.msra.mxu0 0
    %979 = vmatprep.subr.bf16.mxu0 0
    %980 = vmatpush1.bf16.msra.mxu0 0
    %981 = vmatprep.subr.bf16.mxu0 0
    %982 = vmatpush1.bf16.msra.mxu0 0
    %983 = vmatprep.subr.bf16.mxu0 0
    %984 = vmatpush1.bf16.msra.mxu0 0
    %985 = vmatprep.subr.bf16.mxu0 0
    %986 = vmatpush1.bf16.msra.mxu0 0
    %987 = vmatprep.subr.bf16.mxu0 0
    %988 = vmatpush1.bf16.msra.mxu0 0
    %989 = vmatprep.subr.bf16.mxu0 0
    %990 = vmatpush1.bf16.msra.mxu0 0
    %991 = vmatprep.subr.bf16.mxu0 0
    %992 = vmatpush1.bf16.msra.mxu0 0
    %993 = vmatprep.mubr.bf16.mxu0 0
    %994 = vmatmul.mubr.bf16.gmra.mrb[0].mxu0 %v959
    %v995 = vpop.f32.mrb[0].mxu0
    %v996 = vadd.f32 0.0, %v995
    %v997 = vpop.f32.mrb[0].mxu0
    %v998 = vpop.f32.mrb[0].mxu0
    %v999 = vpop.f32.mrb[0].mxu0
    %1000 = vdwg.mxu0
    %v1001 = vadd.f32 %v996, %v464
    %1003 = vrot.lane.b32.xlu0 %v1001, 96
    %v1004 = vpop.permute.xlu0 %1003
    %vm1006 = vcmask 1048320
    %1007 = vst.msk [vmem:[%s11] sm:$0xff] %vm1006, %v1004
    %s1008 = sld [smem:[#allocation3 + $0x3]]
    %p1009 = scmp.ne.s32.totalorder %s1008, 0
    // Predicated region
    $region78: #{decoder_rnn_forward.1} parent=1 // pred_check
      %p1010 = pneg %p1009
    $region79: #{decoder_rnn_forward.1} parent=1 // pred_check_branch
      %1012 = sbr.rel (%p1010) target = $region81
    $region80: #{decoder_rnn_forward.1} parent=1 // pred_region
      %v1013 = vld [vmem:[#allocation2 + $0x18] sm:$0xff]
    $region81: #{decoder_rnn_forward.1} parent=1 // pred_fallthru
      %v1014 = vphi 0, %v1013
    %p1015 = pneg %p1009
    // Predicated region
    $region82: #{decoder_rnn_forward.1} parent=1 // pred_check
      _
    $region83: #{decoder_rnn_forward.1} parent=1 // pred_check_branch
      %1017 = sbr.rel (%p1009) target = $region85
    $region84: #{decoder_rnn_forward.1} parent=1 // pred_region
      %v1018 = vsel %vm224, %v1001, -inf
      %1019 = vmax.xlane.f32.xlu0 %v1018
      %v1020 = vpop.xlane.xlu0 %1019
      %vm1021 = vcmp.ge.f32.partialorder %v1001, %v1020
      %v1022 = vsel %vm1021, %v368, 32
      %v1023 = vsel %vm224, %v1022, 2147483647
      %v1024 = vand.u32 %v1023, 65535
      %v1025 = vshra.s32 %v1023, 16
      %v1026 = vcvt.s32.f32 %v1024
      %v1027 = vcvt.s32.f32 %v1025
      %1028 = vmin.xlane.f32.xlu0 %v1027
      %v1029 = vpop.xlane.xlu0 %1028
      %vm1030 = vcmp.eq.f32.partialorder %v1027, %v1029
      %v1031 = vsel %vm1030, %v1026, inf
      %1032 = vmin.xlane.f32.xlu0 %v1031
      %v1033 = vpop.xlane.xlu0 %1032
      %v1034 = vcvt.f32.s32 %v1033
      %v1035 = vcvt.f32.s32 %v1029
      %v1036 = vshll.u32 %v1035, 16
      %v1037 = vadd.s32 %v1036, %v1034
      %vm1038 = vcmp.eq.s32.totalorder %v368, %v1037
      %v1039 = vsel %vm1038, 1, 0
      %v1040 = vcvt.s32.f32 %v1039
      %v1041 = vpack.c.bf16 %v1040, %v1040
      %v1042 = vld [vmem:[%s8] sm:$0xf]
      %v1043 = vld [vmem:[%s8 + $0x4] sm:$0xf]
      %v1044 = vld [vmem:[%s8 + $0x8] sm:$0xf]
      %v1045 = vld [vmem:[%s8 + $0xc] sm:$0xf]
      %v1050 = vunpack.c.l.b16 %v1042
      %v1051 = vunpack.c.l.b16 %v1043
      %v1052 = vunpack.c.l.b16 %v1044
      %v1053 = vunpack.c.l.b16 %v1045
      %v1054 = vpack.c.b16 %v1051, %v1050
      %v1055 = vpack.c.b16 %v1053, %v1052
      %v1059 = vsel %vm224, %v1041, 0
      %1061 = vmatprep.subr.bf16.mxu0 0
      %1062 = vmatpush1.bf16.msra.mxu0 %v1054
      %1063 = vmatprep.subr.bf16.mxu0 0
      %1064 = vmatpush1.bf16.msra.mxu0 %v1055
      %1065 = vmatprep.subr.bf16.mxu0 0
      %1066 = vmatpush1.bf16.msra.mxu0 0
      %1067 = vmatprep.subr.bf16.mxu0 0
      %1068 = vmatpush1.bf16.msra.mxu0 0
      %1069 = vmatprep.subr.bf16.mxu0 0
      %1070 = vmatpush1.bf16.msra.mxu0 0
      %1071 = vmatprep.subr.bf16.mxu0 0
      %1072 = vmatpush1.bf16.msra.mxu0 0
      %1073 = vmatprep.subr.bf16.mxu0 0
      %1074 = vmatpush1.bf16.msra.mxu0 0
      %1075 = vmatprep.subr.bf16.mxu0 0
      %1076 = vmatpush1.bf16.msra.mxu0 0
      %1077 = vmatprep.subr.bf16.mxu0 0
      %1078 = vmatpush1.bf16.msra.mxu0 0
      %1079 = vmatprep.subr.bf16.mxu0 0
      %1080 = vmatpush1.bf16.msra.mxu0 0
      %1081 = vmatprep.subr.bf16.mxu0 0
      %1082 = vmatpush1.bf16.msra.mxu0 0
      %1083 = vmatprep.subr.bf16.mxu0 0
      %1084 = vmatpush1.bf16.msra.mxu0 0
      %1085 = vmatprep.subr.bf16.mxu0 0
      %1086 = vmatpush1.bf16.msra.mxu0 0
      %1087 = vmatprep.subr.bf16.mxu0 0
      %1088 = vmatpush1.bf16.msra.mxu0 0
      %1089 = vmatprep.subr.bf16.mxu0 0
      %1090 = vmatpush1.bf16.msra.mxu0 0
      %1091 = vmatprep.subr.bf16.mxu0 0
      %1092 = vmatpush1.bf16.msra.mxu0 0
      %1093 = vmatprep.mubr.bf16.mxu0 0
      %1094 = vmatmul.mubr.bf16.gmra.mrb[0].mxu0 %v1059
      %v1095 = vpop.f32.mrb[0].mxu0
      %v1096 = vadd.f32 0.0, %v1095
      %v1097 = vpop.f32.mrb[0].mxu0
      %v1098 = vpop.f32.mrb[0].mxu0
      %v1099 = vpop.f32.mrb[0].mxu0
      %1100 = vdwg.mxu0
    $region85: #{decoder_rnn_forward.1} parent=1 // pred_fallthru
      %v1101 = vphi %v1014, %v1096
    %v1102 = vadd.f32 %v161, %v1101
    %1104 = vrot.lane.b32.xlu0 %v996, 96
    %v1105 = vpop.permute.xlu0 %1104
    %v1107 = vadd.f32 %v1102, %v1105
    %v1108 = vxor.u32 %v1107, 2147483648
    %v1109 = vmul.f32 %v1108, 1.442695
    %v1110 = vpow.pop %v1109
    %v1111 = vadd.f32 %v1110, 1.0
    %v1112 = vrcp.pop %v1111
    %v1113 = vmul.f32 1.0, %v1112
    %v1114 = vadd.f32 %v996, %v389
    %1116 = vrot.lane.b32.xlu0 %v1114, 32
    %v1117 = vpop.permute.xlu0 %1116
    %v1119 = vmul.f32 %v1113, %v1117
    %1121 = vrot.lane.b32.xlu0 %v1119, 64
    %v1122 = vpop.permute.xlu0 %1121
    %v1124 = vadd.f32 %v1102, %v1122
    %v1125 = vtanh.pop %v1124
    %v1126 = vsub.f32 1.0, %v1113
    %1128 = vrot.lane.b32.xlu0 %v1125, 96
    %v1129 = vpop.permute.xlu0 %1128
    %v1131 = vmul.f32 %v1126, %v1129
    %v1132 = vmul.f32 %v1113, %v953
    %v1133 = vadd.f32 %v1131, %v1132
    %v1134 = vpack.c.bf16 %v1133, %v1133
    %1136 = vrot.lane.b32.xlu0 %v1134, 96
    %v1137 = vpop.permute.xlu0 %1136
    %v1139 = vsel %vm224, %v1137, 0
    %1141 = vmatprep.subr.bf16.mxu0 0
    %1142 = vmatpush1.bf16.msra.mxu0 %v320
    %1143 = vmatprep.subr.bf16.mxu0 0
    %1144 = vmatpush1.bf16.msra.mxu0 %v321
    %1145 = vmatprep.subr.bf16.mxu0 0
    %1146 = vmatpush1.bf16.msra.mxu0 0
    %1147 = vmatprep.subr.bf16.mxu0 0
    %1148 = vmatpush1.bf16.msra.mxu0 0
    %1149 = vmatprep.subr.bf16.mxu0 0
    %1150 = vmatpush1.bf16.msra.mxu0 0
    %1151 = vmatprep.subr.bf16.mxu0 0
    %1152 = vmatpush1.bf16.msra.mxu0 0
    %1153 = vmatprep.subr.bf16.mxu0 0
    %1154 = vmatpush1.bf16.msra.mxu0 0
    %1155 = vmatprep.subr.bf16.mxu0 0
    %1156 = vmatpush1.bf16.msra.mxu0 0
    %1157 = vmatprep.subr.bf16.mxu0 0
    %1158 = vmatpush1.bf16.msra.mxu0 0
    %1159 = vmatprep.subr.bf16.mxu0 0
    %1160 = vmatpush1.bf16.msra.mxu0 0
    %1161 = vmatprep.subr.bf16.mxu0 0
    %1162 = vmatpush1.bf16.msra.mxu0 0
    %1163 = vmatprep.subr.bf16.mxu0 0
    %1164 = vmatpush1.bf16.msra.mxu0 0
    %1165 = vmatprep.subr.bf16.mxu0 0
    %1166 = vmatpush1.bf16.msra.mxu0 0
    %1167 = vmatprep.subr.bf16.mxu0 0
    %1168 = vmatpush1.bf16.msra.mxu0 0
    %1169 = vmatprep.subr.bf16.mxu0 0
    %1170 = vmatpush1.bf16.msra.mxu0 0
    %1171 = vmatprep.subr.bf16.mxu0 0
    %1172 = vmatpush1.bf16.msra.mxu0 0
    %1173 = vmatprep.mubr.bf16.mxu0 0
    %1174 = vmatmul.mubr.bf16.gmra.mrb[0].mxu0 %v1139
    %v1175 = vpop.f32.mrb[0].mxu0
    %v1176 = vadd.f32 0.0, %v1175
    %v1177 = vpop.f32.mrb[0].mxu0
    %v1178 = vpop.f32.mrb[0].mxu0
    %v1179 = vpop.f32.mrb[0].mxu0
    %1180 = vdwg.mxu0
    %v1181 = vadd.f32 %v1176, %v464
    %1182 = vst.msk [vmem:[%s11 + $0x8] sm:$0xff] %vm224, %v1181
    %s1183 = sld [smem:[#allocation3 + $0x4]]
    %p1184 = scmp.ne.s32.totalorder %s1183, 0
    // Predicated region
    $region86: #{decoder_rnn_forward.1} parent=1 // pred_check
      %p1185 = pneg %p1184
    $region87: #{decoder_rnn_forward.1} parent=1 // pred_check_branch
      %1187 = sbr.rel (%p1185) target = $region89
    $region88: #{decoder_rnn_forward.1} parent=1 // pred_region
      %v1188 = vld [vmem:[#allocation2 + $0x20] sm:$0xff]
    $region89: #{decoder_rnn_forward.1} parent=1 // pred_fallthru
      %v1189 = vphi 0, %v1188
    %p1190 = pneg %p1184
    // Predicated region
    $region90: #{decoder_rnn_forward.1} parent=1 // pred_check
      _
    $region91: #{decoder_rnn_forward.1} parent=1 // pred_check_branch
      %1192 = sbr.rel (%p1184) target = $region93
    $region92: #{decoder_rnn_forward.1} parent=1 // pred_region
      %v1193 = vsel %vm224, %v1181, -inf
      %1194 = vmax.xlane.f32.xlu0 %v1193
      %v1195 = vpop.xlane.xlu0 %1194
      %vm1196 = vcmp.ge.f32.partialorder %v1181, %v1195
      %v1197 = vsel %vm1196, %v368, 32
      %v1198 = vsel %vm224, %v1197, 2147483647
      %v1199 = vand.u32 %v1198, 65535
      %v1200 = vshra.s32 %v1198, 16
      %v1201 = vcvt.s32.f32 %v1199
      %v1202 = vcvt.s32.f32 %v1200
      %1203 = vmin.xlane.f32.xlu0 %v1202
      %v1204 = vpop.xlane.xlu0 %1203
      %vm1205 = vcmp.eq.f32.partialorder %v1202, %v1204
      %v1206 = vsel %vm1205, %v1201, inf
      %1207 = vmin.xlane.f32.xlu0 %v1206
      %v1208 = vpop.xlane.xlu0 %1207
      %v1209 = vcvt.f32.s32 %v1208
      %v1210 = vcvt.f32.s32 %v1204
      %v1211 = vshll.u32 %v1210, 16
      %v1212 = vadd.s32 %v1211, %v1209
      %vm1213 = vcmp.eq.s32.totalorder %v368, %v1212
      %v1214 = vsel %vm1213, 1, 0
      %v1215 = vcvt.s32.f32 %v1214
      %v1216 = vpack.c.bf16 %v1215, %v1215
      %v1217 = vld [vmem:[%s8] sm:$0xf]
      %v1218 = vld [vmem:[%s8 + $0x4] sm:$0xf]
      %v1219 = vld [vmem:[%s8 + $0x8] sm:$0xf]
      %v1220 = vld [vmem:[%s8 + $0xc] sm:$0xf]
      %v1225 = vunpack.c.l.b16 %v1217
      %v1226 = vunpack.c.l.b16 %v1218
      %v1227 = vunpack.c.l.b16 %v1219
      %v1228 = vunpack.c.l.b16 %v1220
      %v1229 = vpack.c.b16 %v1226, %v1225
      %v1230 = vpack.c.b16 %v1228, %v1227
      %v1234 = vsel %vm224, %v1216, 0
      %1236 = vmatprep.subr.bf16.mxu0 0
      %1237 = vmatpush1.bf16.msra.mxu0 %v1229
      %1238 = vmatprep.subr.bf16.mxu0 0
      %1239 = vmatpush1.bf16.msra.mxu0 %v1230
      %1240 = vmatprep.subr.bf16.mxu0 0
      %1241 = vmatpush1.bf16.msra.mxu0 0
      %1242 = vmatprep.subr.bf16.mxu0 0
      %1243 = vmatpush1.bf16.msra.mxu0 0
      %1244 = vmatprep.subr.bf16.mxu0 0
      %1245 = vmatpush1.bf16.msra.mxu0 0
      %1246 = vmatprep.subr.bf16.mxu0 0
      %1247 = vmatpush1.bf16.msra.mxu0 0
      %1248 = vmatprep.subr.bf16.mxu0 0
      %1249 = vmatpush1.bf16.msra.mxu0 0
      %1250 = vmatprep.subr.bf16.mxu0 0
      %1251 = vmatpush1.bf16.msra.mxu0 0
      %1252 = vmatprep.subr.bf16.mxu0 0
      %1253 = vmatpush1.bf16.msra.mxu0 0
      %1254 = vmatprep.subr.bf16.mxu0 0
      %1255 = vmatpush1.bf16.msra.mxu0 0
      %1256 = vmatprep.subr.bf16.mxu0 0
      %1257 = vmatpush1.bf16.msra.mxu0 0
      %1258 = vmatprep.subr.bf16.mxu0 0
      %1259 = vmatpush1.bf16.msra.mxu0 0
      %1260 = vmatprep.subr.bf16.mxu0 0
      %1261 = vmatpush1.bf16.msra.mxu0 0
      %1262 = vmatprep.subr.bf16.mxu0 0
      %1263 = vmatpush1.bf16.msra.mxu0 0
      %1264 = vmatprep.subr.bf16.mxu0 0
      %1265 = vmatpush1.bf16.msra.mxu0 0
      %1266 = vmatprep.subr.bf16.mxu0 0
      %1267 = vmatpush1.bf16.msra.mxu0 0
      %1268 = vmatprep.mubr.bf16.mxu0 0
      %1269 = vmatmul.mubr.bf16.gmra.mrb[0].mxu0 %v1234
      %v1270 = vpop.f32.mrb[0].mxu0
      %v1271 = vadd.f32 0.0, %v1270
      %v1272 = vpop.f32.mrb[0].mxu0
      %v1273 = vpop.f32.mrb[0].mxu0
      %v1274 = vpop.f32.mrb[0].mxu0
      %1275 = vdwg.mxu0
    $region93: #{decoder_rnn_forward.1} parent=1 // pred_fallthru
      %v1276 = vphi %v1189, %v1271
    %v1277 = vadd.f32 %v161, %v1276
    %1279 = vrot.lane.b32.xlu0 %v1176, 96
    %v1280 = vpop.permute.xlu0 %1279
    %v1282 = vadd.f32 %v1277, %v1280
    %v1283 = vxor.u32 %v1282, 2147483648
    %v1284 = vmul.f32 %v1283, 1.442695
    %v1285 = vpow.pop %v1284
    %v1286 = vadd.f32 %v1285, 1.0
    %v1287 = vrcp.pop %v1286
    %v1288 = vmul.f32 1.0, %v1287
    %v1289 = vadd.f32 %v1176, %v389
    %1291 = vrot.lane.b32.xlu0 %v1289, 32
    %v1292 = vpop.permute.xlu0 %1291
    %v1294 = vmul.f32 %v1288, %v1292
    %1296 = vrot.lane.b32.xlu0 %v1294, 64
    %v1297 = vpop.permute.xlu0 %1296
    %v1299 = vadd.f32 %v1277, %v1297
    %v1300 = vtanh.pop %v1299
    %v1301 = vsub.f32 1.0, %v1288
    %1303 = vrot.lane.b32.xlu0 %v1300, 96
    %v1304 = vpop.permute.xlu0 %1303
    %v1306 = vmul.f32 %v1301, %v1304
    %v1307 = vmul.f32 %v1288, %v1133
    %v1308 = vadd.f32 %v1306, %v1307
    %v1309 = vpack.c.bf16 %v1308, %v1308
    %1311 = vrot.lane.b32.xlu0 %v1309, 96
    %v1312 = vpop.permute.xlu0 %1311
    %v1314 = vsel %vm224, %v1312, 0
    %1316 = vmatprep.subr.bf16.mxu0 0
    %1317 = vmatpush1.bf16.msra.mxu0 %v320
    %1318 = vmatprep.subr.bf16.mxu0 0
    %1319 = vmatpush1.bf16.msra.mxu0 %v321
    %1320 = vmatprep.subr.bf16.mxu0 0
    %1321 = vmatpush1.bf16.msra.mxu0 0
    %1322 = vmatprep.subr.bf16.mxu0 0
    %1323 = vmatpush1.bf16.msra.mxu0 0
    %1324 = vmatprep.subr.bf16.mxu0 0
    %1325 = vmatpush1.bf16.msra.mxu0 0
    %1326 = vmatprep.subr.bf16.mxu0 0
    %1327 = vmatpush1.bf16.msra.mxu0 0
    %1328 = vmatprep.subr.bf16.mxu0 0
    %1329 = vmatpush1.bf16.msra.mxu0 0
    %1330 = vmatprep.subr.bf16.mxu0 0
    %1331 = vmatpush1.bf16.msra.mxu0 0
    %1332 = vmatprep.subr.bf16.mxu0 0
    %1333 = vmatpush1.bf16.msra.mxu0 0
    %1334 = vmatprep.subr.bf16.mxu0 0
    %1335 = vmatpush1.bf16.msra.mxu0 0
    %1336 = vmatprep.subr.bf16.mxu0 0
    %1337 = vmatpush1.bf16.msra.mxu0 0
    %1338 = vmatprep.subr.bf16.mxu0 0
    %1339 = vmatpush1.bf16.msra.mxu0 0
    %1340 = vmatprep.subr.bf16.mxu0 0
    %1341 = vmatpush1.bf16.msra.mxu0 0
    %1342 = vmatprep.subr.bf16.mxu0 0
    %1343 = vmatpush1.bf16.msra.mxu0 0
    %1344 = vmatprep.subr.bf16.mxu0 0
    %1345 = vmatpush1.bf16.msra.mxu0 0
    %1346 = vmatprep.subr.bf16.mxu0 0
    %1347 = vmatpush1.bf16.msra.mxu0 0
    %1348 = vmatprep.mubr.bf16.mxu0 0
    %1349 = vmatmul.mubr.bf16.gmra.mrb[0].mxu0 %v1314
    %v1350 = vpop.f32.mrb[0].mxu0
    %v1351 = vadd.f32 0.0, %v1350
    %v1352 = vpop.f32.mrb[0].mxu0
    %v1353 = vpop.f32.mrb[0].mxu0
    %v1354 = vpop.f32.mrb[0].mxu0
    %1355 = vdwg.mxu0
    %v1356 = vadd.f32 %v1351, %v464
    %1358 = vrot.lane.b32.xlu0 %v1356, 32
    %v1359 = vpop.permute.xlu0 %1358
    %1361 = vst.msk [vmem:[%s11 + $0x8] sm:$0xff] %vm646, %v1359
    %s1362 = sld [smem:[#allocation3 + $0x5]]
    %p1363 = scmp.ne.s32.totalorder %s1362, 0
    // Predicated region
    $region94: #{decoder_rnn_forward.1} parent=1 // pred_check
      %p1364 = pneg %p1363
    $region95: #{decoder_rnn_forward.1} parent=1 // pred_check_branch
      %1366 = sbr.rel (%p1364) target = $region97
    $region96: #{decoder_rnn_forward.1} parent=1 // pred_region
      %v1367 = vld [vmem:[#allocation2 + $0x28] sm:$0xff]
    $region97: #{decoder_rnn_forward.1} parent=1 // pred_fallthru
      %v1368 = vphi 0, %v1367
    %p1369 = pneg %p1363
    // Predicated region
    $region98: #{decoder_rnn_forward.1} parent=1 // pred_check
      _
    $region99: #{decoder_rnn_forward.1} parent=1 // pred_check_branch
      %1371 = sbr.rel (%p1363) target = $region101
    $region100: #{decoder_rnn_forward.1} parent=1 // pred_region
      %v1372 = vsel %vm224, %v1356, -inf
      %1373 = vmax.xlane.f32.xlu0 %v1372
      %v1374 = vpop.xlane.xlu0 %1373
      %vm1375 = vcmp.ge.f32.partialorder %v1356, %v1374
      %v1376 = vsel %vm1375, %v368, 32
      %v1377 = vsel %vm224, %v1376, 2147483647
      %v1378 = vand.u32 %v1377, 65535
      %v1379 = vshra.s32 %v1377, 16
      %v1380 = vcvt.s32.f32 %v1378
      %v1381 = vcvt.s32.f32 %v1379
      %1382 = vmin.xlane.f32.xlu0 %v1381
      %v1383 = vpop.xlane.xlu0 %1382
      %vm1384 = vcmp.eq.f32.partialorder %v1381, %v1383
      %v1385 = vsel %vm1384, %v1380, inf
      %1386 = vmin.xlane.f32.xlu0 %v1385
      %v1387 = vpop.xlane.xlu0 %1386
      %v1388 = vcvt.f32.s32 %v1387
      %v1389 = vcvt.f32.s32 %v1383
      %v1390 = vshll.u32 %v1389, 16
      %v1391 = vadd.s32 %v1390, %v1388
      %vm1392 = vcmp.eq.s32.totalorder %v368, %v1391
      %v1393 = vsel %vm1392, 1, 0
      %v1394 = vcvt.s32.f32 %v1393
      %v1395 = vpack.c.bf16 %v1394, %v1394
      %v1396 = vld [vmem:[%s8] sm:$0xf]
      %v1397 = vld [vmem:[%s8 + $0x4] sm:$0xf]
      %v1398 = vld [vmem:[%s8 + $0x8] sm:$0xf]
      %v1399 = vld [vmem:[%s8 + $0xc] sm:$0xf]
      %v1404 = vunpack.c.l.b16 %v1396
      %v1405 = vunpack.c.l.b16 %v1397
      %v1406 = vunpack.c.l.b16 %v1398
      %v1407 = vunpack.c.l.b16 %v1399
      %v1408 = vpack.c.b16 %v1405, %v1404
      %v1409 = vpack.c.b16 %v1407, %v1406
      %v1413 = vsel %vm224, %v1395, 0
      %1415 = vmatprep.subr.bf16.mxu0 0
      %1416 = vmatpush1.bf16.msra.mxu0 %v1408
      %1417 = vmatprep.subr.bf16.mxu0 0
      %1418 = vmatpush1.bf16.msra.mxu0 %v1409
      %1419 = vmatprep.subr.bf16.mxu0 0
      %1420 = vmatpush1.bf16.msra.mxu0 0
      %1421 = vmatprep.subr.bf16.mxu0 0
      %1422 = vmatpush1.bf16.msra.mxu0 0
      %1423 = vmatprep.subr.bf16.mxu0 0
      %1424 = vmatpush1.bf16.msra.mxu0 0
      %1425 = vmatprep.subr.bf16.mxu0 0
      %1426 = vmatpush1.bf16.msra.mxu0 0
      %1427 = vmatprep.subr.bf16.mxu0 0
      %1428 = vmatpush1.bf16.msra.mxu0 0
      %1429 = vmatprep.subr.bf16.mxu0 0
      %1430 = vmatpush1.bf16.msra.mxu0 0
      %1431 = vmatprep.subr.bf16.mxu0 0
      %1432 = vmatpush1.bf16.msra.mxu0 0
      %1433 = vmatprep.subr.bf16.mxu0 0
      %1434 = vmatpush1.bf16.msra.mxu0 0
      %1435 = vmatprep.subr.bf16.mxu0 0
      %1436 = vmatpush1.bf16.msra.mxu0 0
      %1437 = vmatprep.subr.bf16.mxu0 0
      %1438 = vmatpush1.bf16.msra.mxu0 0
      %1439 = vmatprep.subr.bf16.mxu0 0
      %1440 = vmatpush1.bf16.msra.mxu0 0
      %1441 = vmatprep.subr.bf16.mxu0 0
      %1442 = vmatpush1.bf16.msra.mxu0 0
      %1443 = vmatprep.subr.bf16.mxu0 0
      %1444 = vmatpush1.bf16.msra.mxu0 0
      %1445 = vmatprep.subr.bf16.mxu0 0
      %1446 = vmatpush1.bf16.msra.mxu0 0
      %1447 = vmatprep.mubr.bf16.mxu0 0
      %1448 = vmatmul.mubr.bf16.gmra.mrb[0].mxu0 %v1413
      %v1449 = vpop.f32.mrb[0].mxu0
      %v1450 = vadd.f32 0.0, %v1449
      %v1451 = vpop.f32.mrb[0].mxu0
      %v1452 = vpop.f32.mrb[0].mxu0
      %v1453 = vpop.f32.mrb[0].mxu0
      %1454 = vdwg.mxu0
    $region101: #{decoder_rnn_forward.1} parent=1 // pred_fallthru
      %v1455 = vphi %v1368, %v1450
    %v1456 = vadd.f32 %v161, %v1455
    %1458 = vrot.lane.b32.xlu0 %v1351, 96
    %v1459 = vpop.permute.xlu0 %1458
    %v1461 = vadd.f32 %v1456, %v1459
    %v1462 = vxor.u32 %v1461, 2147483648
    %v1463 = vmul.f32 %v1462, 1.442695
    %v1464 = vpow.pop %v1463
    %v1465 = vadd.f32 %v1464, 1.0
    %v1466 = vrcp.pop %v1465
    %v1467 = vmul.f32 1.0, %v1466
    %v1468 = vadd.f32 %v1351, %v389
    %1470 = vrot.lane.b32.xlu0 %v1468, 32
    %v1471 = vpop.permute.xlu0 %1470
    %v1473 = vmul.f32 %v1467, %v1471
    %1475 = vrot.lane.b32.xlu0 %v1473, 64
    %v1476 = vpop.permute.xlu0 %1475
    %v1478 = vadd.f32 %v1456, %v1476
    %v1479 = vtanh.pop %v1478
    %v1480 = vsub.f32 1.0, %v1467
    %1482 = vrot.lane.b32.xlu0 %v1479, 96
    %v1483 = vpop.permute.xlu0 %1482
    %v1485 = vmul.f32 %v1480, %v1483
    %v1486 = vmul.f32 %v1467, %v1308
    %v1487 = vadd.f32 %v1485, %v1486
    %v1488 = vpack.c.bf16 %v1487, %v1487
    %1490 = vrot.lane.b32.xlu0 %v1488, 96
    %v1491 = vpop.permute.xlu0 %1490
    %v1493 = vsel %vm224, %v1491, 0
    %1495 = vmatprep.subr.bf16.mxu0 0
    %1496 = vmatpush1.bf16.msra.mxu0 %v320
    %1497 = vmatprep.subr.bf16.mxu0 0
    %1498 = vmatpush1.bf16.msra.mxu0 %v321
    %1499 = vmatprep.subr.bf16.mxu0 0
    %1500 = vmatpush1.bf16.msra.mxu0 0
    %1501 = vmatprep.subr.bf16.mxu0 0
    %1502 = vmatpush1.bf16.msra.mxu0 0
    %1503 = vmatprep.subr.bf16.mxu0 0
    %1504 = vmatpush1.bf16.msra.mxu0 0
    %1505 = vmatprep.subr.bf16.mxu0 0
    %1506 = vmatpush1.bf16.msra.mxu0 0
    %1507 = vmatprep.subr.bf16.mxu0 0
    %1508 = vmatpush1.bf16.msra.mxu0 0
    %1509 = vmatprep.subr.bf16.mxu0 0
    %1510 = vmatpush1.bf16.msra.mxu0 0
    %1511 = vmatprep.subr.bf16.mxu0 0
    %1512 = vmatpush1.bf16.msra.mxu0 0
    %1513 = vmatprep.subr.bf16.mxu0 0
    %1514 = vmatpush1.bf16.msra.mxu0 0
    %1515 = vmatprep.subr.bf16.mxu0 0
    %1516 = vmatpush1.bf16.msra.mxu0 0
    %1517 = vmatprep.subr.bf16.mxu0 0
    %1518 = vmatpush1.bf16.msra.mxu0 0
    %1519 = vmatprep.subr.bf16.mxu0 0
    %1520 = vmatpush1.bf16.msra.mxu0 0
    %1521 = vmatprep.subr.bf16.mxu0 0
    %1522 = vmatpush1.bf16.msra.mxu0 0
    %1523 = vmatprep.subr.bf16.mxu0 0
    %1524 = vmatpush1.bf16.msra.mxu0 0
    %1525 = vmatprep.subr.bf16.mxu0 0
    %1526 = vmatpush1.bf16.msra.mxu0 0
    %1527 = vmatprep.mubr.bf16.mxu0 0
    %1528 = vmatmul.mubr.bf16.gmra.mrb[0].mxu0 %v1493
    %v1529 = vpop.f32.mrb[0].mxu0
    %v1530 = vadd.f32 0.0, %v1529
    %v1531 = vpop.f32.mrb[0].mxu0
    %v1532 = vpop.f32.mrb[0].mxu0
    %v1533 = vpop.f32.mrb[0].mxu0
    %1534 = vdwg.mxu0
    %v1535 = vadd.f32 %v1530, %v464
    %1537 = vrot.lane.b32.xlu0 %v1535, 64
    %v1538 = vpop.permute.xlu0 %1537
    %1540 = vst.msk [vmem:[%s11 + $0x8] sm:$0xff] %vm826, %v1538
    %s1541 = sld [smem:[#allocation3 + $0x6]]
    %p1542 = scmp.ne.s32.totalorder %s1541, 0
    // Predicated region
    $region102: #{decoder_rnn_forward.1} parent=1 // pred_check
      %p1543 = pneg %p1542
    $region103: #{decoder_rnn_forward.1} parent=1 // pred_check_branch
      %1545 = sbr.rel (%p1543) target = $region105
    $region104: #{decoder_rnn_forward.1} parent=1 // pred_region
      %v1546 = vld [vmem:[#allocation2 + $0x30] sm:$0xff]
    $region105: #{decoder_rnn_forward.1} parent=1 // pred_fallthru
      %v1547 = vphi 0, %v1546
    %p1548 = pneg %p1542
    // Predicated region
    $region106: #{decoder_rnn_forward.1} parent=1 // pred_check
      _
    $region107: #{decoder_rnn_forward.1} parent=1 // pred_check_branch
      %1550 = sbr.rel (%p1542) target = $region109
    $region108: #{decoder_rnn_forward.1} parent=1 // pred_region
      %v1551 = vsel %vm224, %v1535, -inf
      %1552 = vmax.xlane.f32.xlu0 %v1551
      %v1553 = vpop.xlane.xlu0 %1552
      %vm1554 = vcmp.ge.f32.partialorder %v1535, %v1553
      %v1555 = vsel %vm1554, %v368, 32
      %v1556 = vsel %vm224, %v1555, 2147483647
      %v1557 = vand.u32 %v1556, 65535
      %v1558 = vshra.s32 %v1556, 16
      %v1559 = vcvt.s32.f32 %v1557
      %v1560 = vcvt.s32.f32 %v1558
      %1561 = vmin.xlane.f32.xlu0 %v1560
      %v1562 = vpop.xlane.xlu0 %1561
      %vm1563 = vcmp.eq.f32.partialorder %v1560, %v1562
      %v1564 = vsel %vm1563, %v1559, inf
      %1565 = vmin.xlane.f32.xlu0 %v1564
      %v1566 = vpop.xlane.xlu0 %1565
      %v1567 = vcvt.f32.s32 %v1566
      %v1568 = vcvt.f32.s32 %v1562
      %v1569 = vshll.u32 %v1568, 16
      %v1570 = vadd.s32 %v1569, %v1567
      %vm1571 = vcmp.eq.s32.totalorder %v368, %v1570
      %v1572 = vsel %vm1571, 1, 0
      %v1573 = vcvt.s32.f32 %v1572
      %v1574 = vpack.c.bf16 %v1573, %v1573
      %v1575 = vld [vmem:[%s8] sm:$0xf]
      %v1576 = vld [vmem:[%s8 + $0x4] sm:$0xf]
      %v1577 = vld [vmem:[%s8 + $0x8] sm:$0xf]
      %v1578 = vld [vmem:[%s8 + $0xc] sm:$0xf]
      %v1583 = vunpack.c.l.b16 %v1575
      %v1584 = vunpack.c.l.b16 %v1576
      %v1585 = vunpack.c.l.b16 %v1577
      %v1586 = vunpack.c.l.b16 %v1578
      %v1587 = vpack.c.b16 %v1584, %v1583
      %v1588 = vpack.c.b16 %v1586, %v1585
      %v1592 = vsel %vm224, %v1574, 0
      %1594 = vmatprep.subr.bf16.mxu0 0
      %1595 = vmatpush1.bf16.msra.mxu0 %v1587
      %1596 = vmatprep.subr.bf16.mxu0 0
      %1597 = vmatpush1.bf16.msra.mxu0 %v1588
      %1598 = vmatprep.subr.bf16.mxu0 0
      %1599 = vmatpush1.bf16.msra.mxu0 0
      %1600 = vmatprep.subr.bf16.mxu0 0
      %1601 = vmatpush1.bf16.msra.mxu0 0
      %1602 = vmatprep.subr.bf16.mxu0 0
      %1603 = vmatpush1.bf16.msra.mxu0 0
      %1604 = vmatprep.subr.bf16.mxu0 0
      %1605 = vmatpush1.bf16.msra.mxu0 0
      %1606 = vmatprep.subr.bf16.mxu0 0
      %1607 = vmatpush1.bf16.msra.mxu0 0
      %1608 = vmatprep.subr.bf16.mxu0 0
      %1609 = vmatpush1.bf16.msra.mxu0 0
      %1610 = vmatprep.subr.bf16.mxu0 0
      %1611 = vmatpush1.bf16.msra.mxu0 0
      %1612 = vmatprep.subr.bf16.mxu0 0
      %1613 = vmatpush1.bf16.msra.mxu0 0
      %1614 = vmatprep.subr.bf16.mxu0 0
      %1615 = vmatpush1.bf16.msra.mxu0 0
      %1616 = vmatprep.subr.bf16.mxu0 0
      %1617 = vmatpush1.bf16.msra.mxu0 0
      %1618 = vmatprep.subr.bf16.mxu0 0
      %1619 = vmatpush1.bf16.msra.mxu0 0
      %1620 = vmatprep.subr.bf16.mxu0 0
      %1621 = vmatpush1.bf16.msra.mxu0 0
      %1622 = vmatprep.subr.bf16.mxu0 0
      %1623 = vmatpush1.bf16.msra.mxu0 0
      %1624 = vmatprep.subr.bf16.mxu0 0
      %1625 = vmatpush1.bf16.msra.mxu0 0
      %1626 = vmatprep.mubr.bf16.mxu0 0
      %1627 = vmatmul.mubr.bf16.gmra.mrb[0].mxu0 %v1592
      %v1628 = vpop.f32.mrb[0].mxu0
      %v1629 = vadd.f32 0.0, %v1628
      %v1630 = vpop.f32.mrb[0].mxu0
      %v1631 = vpop.f32.mrb[0].mxu0
      %v1632 = vpop.f32.mrb[0].mxu0
      %1633 = vdwg.mxu0
    $region109: #{decoder_rnn_forward.1} parent=1 // pred_fallthru
      %v1634 = vphi %v1547, %v1629
    %v1635 = vadd.f32 %v161, %v1634
    %1637 = vrot.lane.b32.xlu0 %v1530, 96
    %v1638 = vpop.permute.xlu0 %1637
    %v1640 = vadd.f32 %v1635, %v1638
    %v1641 = vxor.u32 %v1640, 2147483648
    %v1642 = vmul.f32 %v1641, 1.442695
    %v1643 = vpow.pop %v1642
    %v1644 = vadd.f32 %v1643, 1.0
    %v1645 = vrcp.pop %v1644
    %v1646 = vmul.f32 1.0, %v1645
    %v1647 = vadd.f32 %v1530, %v389
    %1649 = vrot.lane.b32.xlu0 %v1647, 32
    %v1650 = vpop.permute.xlu0 %1649
    %v1652 = vmul.f32 %v1646, %v1650
    %1654 = vrot.lane.b32.xlu0 %v1652, 64
    %v1655 = vpop.permute.xlu0 %1654
    %v1657 = vadd.f32 %v1635, %v1655
    %v1658 = vtanh.pop %v1657
    %v1659 = vsub.f32 1.0, %v1646
    %1661 = vrot.lane.b32.xlu0 %v1658, 96
    %v1662 = vpop.permute.xlu0 %1661
    %v1664 = vmul.f32 %v1659, %v1662
    %v1665 = vmul.f32 %v1646, %v1487
    %v1666 = vadd.f32 %v1664, %v1665
    %v1667 = vpack.c.bf16 %v1666, %v1666
    %1669 = vrot.lane.b32.xlu0 %v1667, 96
    %v1670 = vpop.permute.xlu0 %1669
    %v1672 = vsel %vm224, %v1670, 0
    %1674 = vmatprep.subr.bf16.mxu0 0
    %1675 = vmatpush1.bf16.msra.mxu0 %v320
    %1676 = vmatprep.subr.bf16.mxu0 0
    %1677 = vmatpush1.bf16.msra.mxu0 %v321
    %1678 = vmatprep.subr.bf16.mxu0 0
    %1679 = vmatpush1.bf16.msra.mxu0 0
    %1680 = vmatprep.subr.bf16.mxu0 0
    %1681 = vmatpush1.bf16.msra.mxu0 0
    %1682 = vmatprep.subr.bf16.mxu0 0
    %1683 = vmatpush1.bf16.msra.mxu0 0
    %1684 = vmatprep.subr.bf16.mxu0 0
    %1685 = vmatpush1.bf16.msra.mxu0 0
    %1686 = vmatprep.subr.bf16.mxu0 0
    %1687 = vmatpush1.bf16.msra.mxu0 0
    %1688 = vmatprep.subr.bf16.mxu0 0
    %1689 = vmatpush1.bf16.msra.mxu0 0
    %1690 = vmatprep.subr.bf16.mxu0 0
    %1691 = vmatpush1.bf16.msra.mxu0 0
    %1692 = vmatprep.subr.bf16.mxu0 0
    %1693 = vmatpush1.bf16.msra.mxu0 0
    %1694 = vmatprep.subr.bf16.mxu0 0
    %1695 = vmatpush1.bf16.msra.mxu0 0
    %1696 = vmatprep.subr.bf16.mxu0 0
    %1697 = vmatpush1.bf16.msra.mxu0 0
    %1698 = vmatprep.subr.bf16.mxu0 0
    %1699 = vmatpush1.bf16.msra.mxu0 0
    %1700 = vmatprep.subr.bf16.mxu0 0
    %1701 = vmatpush1.bf16.msra.mxu0 0
    %1702 = vmatprep.subr.bf16.mxu0 0
    %1703 = vmatpush1.bf16.msra.mxu0 0
    %1704 = vmatprep.subr.bf16.mxu0 0
    %1705 = vmatpush1.bf16.msra.mxu0 0
    %1706 = vmatprep.mubr.bf16.mxu0 0
    %1707 = vmatmul.mubr.bf16.gmra.mrb[0].mxu0 %v1672
    %v1708 = vpop.f32.mrb[0].mxu0
    %v1709 = vadd.f32 0.0, %v1708
    %v1710 = vpop.f32.mrb[0].mxu0
    %v1711 = vpop.f32.mrb[0].mxu0
    %v1712 = vpop.f32.mrb[0].mxu0
    %1713 = vdwg.mxu0
    %v1714 = vadd.f32 %v1709, %v464
    %1716 = vrot.lane.b32.xlu0 %v1714, 96
    %v1717 = vpop.permute.xlu0 %1716
    %1719 = vst.msk [vmem:[%s11 + $0x8] sm:$0xff] %vm1006, %v1717
    // Predicated region
    $region110: #{decoder_rnn_forward.1} parent=1 // pred_check
      _
    $region111: #{decoder_rnn_forward.1} parent=1 // pred_check_branch
      %1721 = sbr.rel (0) target = $region113
    $region112: #{decoder_rnn_forward.1} parent=1 // pred_region
      _
    $region113: #{decoder_rnn_forward.1} parent=1 // pred_fallthru
      _
    // Predicated region
    $region114: #{decoder_rnn_forward.1} parent=1 // pred_check
      _
    $region115: #{decoder_rnn_forward.1} parent=1 // pred_check_branch
      %1723 = sbr.rel (0) target = $region117
    $region116: #{decoder_rnn_forward.1} parent=1 // pred_region
      _
    $region117: #{decoder_rnn_forward.1} parent=1 // pred_fallthru
      _
    %1724 = vsyncpa [#allocation4], 1
    %1725 = vsyncpa [#allocation5], 1

</llo_original>
